<compile_context>
chip_gen: v5e
topology: v5e:2x2
jax: 0.10.0
libtpu: 0.0.40
codegen_flags: <defaults>
</compile_context>

<pallas_src>
import numpy as np

import jax
import jax.numpy as jnp
from jax import lax
from jax.experimental import pallas as pl
from jax.experimental.pallas import tpu as pltpu

# ----------------------------- small synthetic config -----------------------
B = 2                     # batch
IMG_C, IMG_H, IMG_W = 3, 16, 16
PATCH = 8
NUM_PATCH = (IMG_H // PATCH) * (IMG_W // PATCH)    # 4 image (prefix) tokens
TXT_LEN = 8                                        # prompt tokens
SEQ = NUM_PATCH + TXT_LEN                          # 12 real tokens
SEQ_PAD = 16                                       # padded rows per batch
LAST = SEQ - 1                                     # last real position (11)
D = 128                   # hidden size
NH = 4                    # attention heads
HD = D // NH              # 32 head dim
FFN = 256                 # MLP intermediate
VOCAB = 256               # vocabulary
NLAYERS = 2               # decoder layers
EPS = 1e-6
ROPE_THETA = 10000.0
DTYPE = jnp.bfloat16      # model dtype (matches torch_dtype=torch.bfloat16)
PATCH_K = IMG_C * PATCH * PATCH                    # 192


# ----------------------------- fused Pallas kernel ---------------------------
def _owl3_fused_kernel(patches_ref, base_ref, pw_ref,
                       rotm_ref, cos_ref, sin_ref, bias_ref,
                       ln1_ref, wqkv_ref, wo_ref, ln2_ref, wgu_ref, wd_ref,
                       lnf_ref, wlm_ref,
                       out_ref, x_ref, ctx_ref):
    layer = pl.program_id(1)

    # ---- layer 0: build the residual stream in VMEM (one matmul + one add) --
    @pl.when(layer == 0)
    def _embed():
        pe = jnp.dot(patches_ref[0], pw_ref[...],
                     preferred_element_type=jnp.float32)          # (SEQ_PAD, D)
        # base = text embeddings at text rows + patch bias at patch rows,
        #        zeros at pad rows (prepared host-side -> no row scatters here)
        x_ref[...] = pe + base_ref[0]

    x = x_ref[...]                                                # (SEQ_PAD, D) f32
    bias = bias_ref[...]                                          # (SEQ_PAD, SEQ_PAD)

    def rmsnorm(h, w):
        var = jnp.mean(h * h, axis=-1, keepdims=True)
        return h * lax.rsqrt(var + EPS) * w

    # ----------------------------- self attention ---------------------------
    h1 = rmsnorm(x, ln1_ref[0].astype(jnp.float32)).astype(DTYPE)
    qkv = jnp.dot(h1, wqkv_ref[0],
                  preferred_element_type=jnp.float32)             # (SEQ_PAD, 3D)
    qk = qkv[:, :2 * D]                                           # contiguous q||k
    v = qkv[:, 2 * D:]

    # RoPE on q||k in ONE matmul: rotate-half is a (2D,2D) block-diag signed
    # permutation.  cos/sin already carry the HD**-0.25 score scaling.
    rot = jnp.dot(qk.astype(DTYPE), rotm_ref[...],
                  preferred_element_type=jnp.float32)             # (SEQ_PAD, 2D)
    qk = qk * cos_ref[...] + rot * sin_ref[...]
    q = qk[:, :D]
    k = qk[:, D:]

    for hi in range(NH):                                          # static NH=4
        sl = slice(hi * HD, (hi + 1) * HD)
        qh = q[:, sl].astype(DTYPE)
        kh = k[:, sl].astype(DTYPE)
        vh = v[:, sl].astype(DTYPE)
        # contract last dims directly: no explicit transpose of kh
        s = lax.dot_general(qh, kh, (((1,), (1,)), ((), ())),
                            preferred_element_type=jnp.float32) + bias
        m = jnp.max(s, axis=-1, keepdims=True)
        e = jnp.exp(s - m)
        p = e * pl.reciprocal(jnp.sum(e, axis=-1, keepdims=True), approx=True)
        # write this head's context into its 32-lane slice of one bf16 buffer
        ctx_ref[:, sl] = jnp.dot(p.astype(DTYPE), vh,
                                 preferred_element_type=jnp.float32).astype(DTYPE)
    # single full-width (K=128) output projection, no per-head accumulation
    x = x + jnp.dot(ctx_ref[...], wo_ref[0], preferred_element_type=jnp.float32)

    # ------------------------------- SwiGLU MLP ------------------------------
    h2 = rmsnorm(x, ln2_ref[0].astype(jnp.float32)).astype(DTYPE)
    gu = jnp.dot(h2, wgu_ref[0], preferred_element_type=jnp.float32)  # (SEQ_PAD,2F)
    g = gu[:, :FFN]
    u = gu[:, FFN:]
    ff = (jax.nn.silu(g) * u).astype(DTYPE)
    x = x + jnp.dot(ff, wd_ref[0], preferred_element_type=jnp.float32)

    x_ref[...] = x                                                # carry to next layer

    # ---- last layer: final RMSNorm + lm_head, store only the last real row --
    @pl.when(layer == NLAYERS - 1)
    def _lm_head():
        hn = rmsnorm(x, lnf_ref[...].astype(jnp.float32)).astype(DTYPE)
        logits = jnp.dot(hn, wlm_ref[...],
                         preferred_element_type=jnp.float32)      # (SEQ_PAD, VOCAB)
        out_ref[0] = logits[LAST:LAST + 1, :].astype(out_ref.dtype)


def owl3_forward_pallas(patches_placed, base, rotm2, cos2, sin2, bias, p):
    const = lambda shape: pl.BlockSpec(shape, lambda b, l: (0, 0))
    per_b = lambda shape: pl.BlockSpec(shape, lambda b, l: (b, 0, 0))
    per_l = lambda shape: pl.BlockSpec(shape, lambda b, l: (l, 0, 0))
    out = pl.pallas_call(
        _owl3_fused_kernel,
        out_shape=jax.ShapeDtypeStruct((B, 1, VOCAB), jnp.float32),
        grid=(B, NLAYERS),
        in_specs=[
            per_b((1, SEQ_PAD, PATCH_K)),          # patches (zero-padded rows)
            per_b((1, SEQ_PAD, D)),                # base: txt emb + patch bias
            const((PATCH_K, D)),                   # patch_w
            const((2 * D, 2 * D)),                 # block-diag rotate-half matrix
            const((SEQ_PAD, 2 * D)),               # cos (pre-scaled, q||k tiled)
            const((SEQ_PAD, 2 * D)),               # sin
            const((SEQ_PAD, SEQ_PAD)),             # causal bias (per batch row)
            per_l((1, 1, D)),                      # ln1
            per_l((1, D, 3 * D)),                  # fused wqkv
            per_l((1, D, D)),                      # wo
            per_l((1, 1, D)),                      # ln2
            per_l((1, D, 2 * FFN)),                # fused gate/up
            per_l((1, FFN, D)),                    # w_down
            const((1, D)),                         # final norm
            const((D, VOCAB)),                     # lm_head
        ],
        out_specs=pl.BlockSpec((1, 1, VOCAB), lambda b, l: (b, 0, 0)),
        scratch_shapes=[pltpu.VMEM((SEQ_PAD, D), jnp.float32),   # residual stream
                        pltpu.VMEM((SEQ_PAD, D), DTYPE)],        # per-head ctx slab
        compiler_params=pltpu.CompilerParams(
            dimension_semantics=("parallel", "arbitrary")),
    )(patches_placed, base, p["patch_w"], rotm2, cos2, sin2, bias,
      p["ln1"], p["wqkv"], p["wo"], p["ln2"], p["wgu"], p["wd"],
      p["lnf"], p["lm_head"])
    return out.reshape(B, VOCAB)


# ----------------------------- host-side constant tables ---------------------
def rope_tables():
    pos = jnp.arange(SEQ_PAD, dtype=jnp.float32)
    inv_freq = 1.0 / (ROPE_THETA ** (jnp.arange(0, HD, 2, dtype=jnp.float32) / HD))
    freqs = pos[:, None] * inv_freq[None, :]                   # (S, HD/2)
    emb = jnp.concatenate([freqs, freqs], axis=-1)             # (S, HD)
    scale = float(HD) ** -0.25                                 # folds 1/sqrt(HD)
    cos = jnp.tile(jnp.cos(emb), (1, 2 * NH)) * scale          # (S, 2D) for q||k
    sin = jnp.tile(jnp.sin(emb), (1, 2 * NH)) * scale
    return cos, sin


def rotate_half_matrix():
    # block-diag signed permutation so that  (q||k) @ M  == rotate_half per head
    m = np.zeros((2 * D, 2 * D), np.float32)
    half = HD // 2
    for h in range(2 * NH):
        off = h * HD
        for d in range(half):
            m[off + d + half, off + d] = -1.0    # first half of rot = -t2
            m[off + d, off + d + half] = 1.0     # second half of rot = +t1
    return jnp.asarray(m, DTYPE)


def causal_bias():
    # per-batch causal mask; pad rows sit at the end so causality also hides them
    r = np.arange(SEQ_PAD)
    causal = r[None, :] <= r[:, None]
    return jnp.asarray(np.where(causal, 0.0, -1e30).astype(np.float32))


# ----------------------------- parameter init --------------------------------
def init_params(key):
    keys = iter(jax.random.split(key, 16))

    def nrm(shape, scale=0.02):
        return (jax.random.normal(next(keys), shape, jnp.float32) * scale).astype(DTYPE)

    return {
        "patch_w": nrm((PATCH_K, D)),
        "patch_b": jnp.zeros((1, D), DTYPE),
        "embed": nrm((VOCAB, D)),
        "lnf": jnp.ones((1, D), DTYPE),
        "lm_head": nrm((D, VOCAB)),
        # per-layer weights pre-stacked along a leading NLAYERS axis and
        # pre-fused (QKV together, gate/up together) for single wide matmuls
        "ln1": jnp.ones((NLAYERS, 1, D), DTYPE),
        "wqkv": nrm((NLAYERS, D, 3 * D)),
        "wo": nrm((NLAYERS, D, D)),
        "ln2": jnp.ones((NLAYERS, 1, D), DTYPE),
        "wgu": nrm((NLAYERS, D, 2 * FFN)),
        "wd": nrm((NLAYERS, FFN, D)),
    }


# ----------------------------- forward (Owl3logits.forward analog) -----------
@jax.jit
def owl3_logits_forward(img_nchw, token_ids, params):
    b, c, h, w = img_nchw.shape
    hp, wp = h // PATCH, w // PATCH

    # image -> flattened patches placed into a zero-padded (SEQ_PAD, K) slab
    patches = img_nchw.reshape(b, c, hp, PATCH, wp, PATCH)
    patches = patches.transpose(0, 2, 4, 1, 3, 5).reshape(b, NUM_PATCH, PATCH_K)
    patches_placed = jnp.zeros((b, SEQ_PAD, PATCH_K), DTYPE)
    patches_placed = patches_placed.at[:, :NUM_PATCH, :].set(patches.astype(DTYPE))

    # "base" residual: patch bias on patch rows + text embeddings on text rows,
    # zeros on pad rows (embedding gather / placement is glue, as before)
    txt = jnp.take(params["embed"], token_ids, axis=0).astype(jnp.float32)  # (B,T,D)
    base = jnp.zeros((b, SEQ_PAD, D), jnp.float32)
    base = base.at[:, :NUM_PATCH, :].set(
        jnp.broadcast_to(params["patch_b"].astype(jnp.float32), (b, NUM_PATCH, D)))
    base = base.at[:, NUM_PATCH:NUM_PATCH + TXT_LEN, :].set(txt)

    cos2, sin2 = rope_tables()
    rotm2 = rotate_half_matrix()
    bias = causal_bias()

    # one fused pallas_call: embed + NLAYERS decoder layers + lm_head
    logits = owl3_forward_pallas(patches_placed, base, rotm2, cos2, sin2, bias,
                                 params)
    return logits                                               # (B, VOCAB) f32


# ----------------------------- main -------------------------------------------
if __name__ == "__main__":
    key = jax.random.PRNGKey(0)
    k_img, k_tok, k_par = jax.random.split(key, 3)

    img = jax.random.normal(k_img, (B, IMG_C, IMG_H, IMG_W), jnp.float32)
    token_ids = jax.random.randint(k_tok, (B, TXT_LEN), 0, VOCAB)
    params = init_params(k_par)

    logits = owl3_logits_forward(img, token_ids, params)
    logits = jax.block_until_ready(logits)

    assert logits.shape == (B, VOCAB), logits.shape
    assert logits.dtype == jnp.float32, logits.dtype
    assert bool(jnp.all(jnp.isfinite(logits)))
    print("KERNEL_OK")
</pallas_src>

<mosaic_0001>
module attributes {stable_mosaic.version = 11 : i64} {
  func.func @_owl3_fused_kernel(%arg0: i32, %arg1: i32, %arg2: memref<1x16x192xbf16, #tpu.memory_space<vmem>>, %arg3: memref<1x16x128xf32, #tpu.memory_space<vmem>>, %arg4: memref<192x128xbf16, #tpu.memory_space<vmem>>, %arg5: memref<256x256xbf16, #tpu.memory_space<vmem>>, %arg6: memref<16x256xf32, #tpu.memory_space<vmem>>, %arg7: memref<16x256xf32, #tpu.memory_space<vmem>>, %arg8: memref<16x16xf32, #tpu.memory_space<vmem>>, %arg9: memref<1x1x128xbf16, #tpu.memory_space<vmem>>, %arg10: memref<1x128x384xbf16, #tpu.memory_space<vmem>>, %arg11: memref<1x128x128xbf16, #tpu.memory_space<vmem>>, %arg12: memref<1x1x128xbf16, #tpu.memory_space<vmem>>, %arg13: memref<1x128x512xbf16, #tpu.memory_space<vmem>>, %arg14: memref<1x256x128xbf16, #tpu.memory_space<vmem>>, %arg15: memref<1x128xbf16, #tpu.memory_space<vmem>>, %arg16: memref<128x256xbf16, #tpu.memory_space<vmem>>, %arg17: memref<1x1x256xf32, #tpu.memory_space<vmem>>, %arg18: memref<16x128xf32, #tpu.memory_space<vmem>>, %arg19: memref<16x128xbf16, #tpu.memory_space<vmem>>) attributes {dimension_semantics = [#tpu.dimension_semantics<parallel>, #tpu.dimension_semantics<arbitrary>], iteration_bounds = array<i64: 2, 2>, scalar_prefetch = 0 : i64, scratch_operands = 2 : i64, tpu.core_type = #tpu.core_type<tc>, window_params = [{transform_indices = @transform_0, window_bounds = array<i64: 1, 16, 192>}, {transform_indices = @transform_1, window_bounds = array<i64: 1, 16, 128>}, {pipeline_mode = #tpu.pipeline_mode<synchronous>, transform_indices = @transform_2, window_bounds = array<i64: 192, 128>}, {pipeline_mode = #tpu.pipeline_mode<synchronous>, transform_indices = @transform_3, window_bounds = array<i64: 256, 256>}, {pipeline_mode = #tpu.pipeline_mode<synchronous>, transform_indices = @transform_4, window_bounds = array<i64: 16, 256>}, {pipeline_mode = #tpu.pipeline_mode<synchronous>, transform_indices = @transform_5, window_bounds = array<i64: 16, 256>}, {pipeline_mode = #tpu.pipeline_mode<synchronous>, transform_indices = @transform_6, window_bounds = array<i64: 16, 16>}, {transform_indices = @transform_7, window_bounds = array<i64: 1, 1, 128>}, {transform_indices = @transform_8, window_bounds = array<i64: 1, 128, 384>}, {transform_indices = @transform_9, window_bounds = array<i64: 1, 128, 128>}, {transform_indices = @transform_10, window_bounds = array<i64: 1, 1, 128>}, {transform_indices = @transform_11, window_bounds = array<i64: 1, 128, 512>}, {transform_indices = @transform_12, window_bounds = array<i64: 1, 256, 128>}, {pipeline_mode = #tpu.pipeline_mode<synchronous>, transform_indices = @transform_13, window_bounds = array<i64: 1, 128>}, {pipeline_mode = #tpu.pipeline_mode<synchronous>, transform_indices = @transform_14, window_bounds = array<i64: 128, 256>}, {transform_indices = @transform_15, window_bounds = array<i64: 1, 1, 256>}]} {
    %c0_i32 = arith.constant 0 : i32
    %0 = arith.cmpi eq, %arg1, %c0_i32 : i32
    %1 = arith.extui %0 : i1 to i32
    %c0_i32_0 = arith.constant 0 : i32
    %2 = arith.cmpi ne, %1, %c0_i32_0 : i32
    scf.if %2 {
      %c0_65 = arith.constant 0 : index
      %c0_66 = arith.constant 0 : index
      %c0_67 = arith.constant 0 : index
      %166 = vector.load %arg2[%c0_65, %c0_66, %c0_67] : memref<1x16x192xbf16, #tpu.memory_space<vmem>>, vector<1x16x192xbf16>
      %167 = vector.shape_cast %166 : vector<1x16x192xbf16> to vector<16x192xbf16>
      %c0_68 = arith.constant 0 : index
      %c0_69 = arith.constant 0 : index
      %168 = vector.load %arg4[%c0_68, %c0_69] : memref<192x128xbf16, #tpu.memory_space<vmem>>, vector<192x128xbf16>
      %cst_70 = arith.constant dense<0.000000e+00> : vector<16x128xf32>
      %169 = tpu.matmul %167, %168, %cst_70 {dimension_numbers = #tpu.dot_dimension_numbers<[1], [0], [0], [1], [0, 0, 1, 1], [], []>} : vector<16x192xbf16>, vector<192x128xbf16>, vector<16x128xf32> -> vector<16x128xf32>
      %c0_71 = arith.constant 0 : index
      %c0_72 = arith.constant 0 : index
      %c0_73 = arith.constant 0 : index
      %170 = vector.load %arg3[%c0_71, %c0_72, %c0_73] : memref<1x16x128xf32, #tpu.memory_space<vmem>>, vector<1x16x128xf32>
      %171 = vector.shape_cast %170 : vector<1x16x128xf32> to vector<16x128xf32>
      %172 = arith.addf %169, %171 : vector<16x128xf32>
      %c0_74 = arith.constant 0 : index
      %c0_75 = arith.constant 0 : index
      %173 = vector.load %arg18[%c0_74, %c0_75] : memref<16x128xf32, #tpu.memory_space<vmem>>, vector<16x128xf32>
      tpu.vector_store %arg18[%c0_74, %c0_75], %172 {strides = array<i32>} : memref<16x128xf32, #tpu.memory_space<vmem>>, vector<16x128xf32>,
    } else {
    }
    %c0 = arith.constant 0 : index
    %c0_1 = arith.constant 0 : index
    %3 = vector.load %arg18[%c0, %c0_1] : memref<16x128xf32, #tpu.memory_space<vmem>>, vector<16x128xf32>
    %c0_2 = arith.constant 0 : index
    %c0_3 = arith.constant 0 : index
    %4 = vector.load %arg8[%c0_2, %c0_3] : memref<16x16xf32, #tpu.memory_space<vmem>>, vector<16x16xf32>
    %c0_4 = arith.constant 0 : index
    %c0_5 = arith.constant 0 : index
    %c0_6 = arith.constant 0 : index
    %5 = vector.load %arg9[%c0_4, %c0_5, %c0_6] : memref<1x1x128xbf16, #tpu.memory_space<vmem>>, vector<1x1x128xbf16>
    %6 = vector.shape_cast %5 : vector<1x1x128xbf16> to vector<1x128xbf16>
    %7 = arith.extf %6 : vector<1x128xbf16> to vector<1x128xf32>
    %8 = arith.mulf %3, %3 : vector<16x128xf32>
    %cst = arith.constant dense<0.000000e+00> : vector<16xf32>
    %9 = vector.multi_reduction <add>, %8, %cst [1] : vector<16x128xf32> to vector<16xf32>
    %10 = vector.shape_cast %9 : vector<16xf32> to vector<16x1xf32>
    %cst_7 = arith.constant 1.280000e+02 : f32
    %11 = vector.broadcast %cst_7 : f32 to vector<16x1xf32>
    %12 = arith.divf %10, %11 : vector<16x1xf32>
    %cst_8 = arith.constant 9.99999997E-7 : f32
    %13 = vector.broadcast %cst_8 : f32 to vector<16x1xf32>
    %14 = arith.addf %12, %13 : vector<16x1xf32>
    %15 = math.rsqrt %14 : vector<16x1xf32>
    %16 = vector.broadcast %15 : vector<16x1xf32> to vector<16x128xf32>
    %17 = arith.mulf %3, %16 : vector<16x128xf32>
    %18 = vector.broadcast %7 : vector<1x128xf32> to vector<16x128xf32>
    %19 = arith.mulf %17, %18 : vector<16x128xf32>
    %20 = arith.truncf %19 : vector<16x128xf32> to vector<16x128xbf16>
    %c0_9 = arith.constant 0 : index
    %c0_10 = arith.constant 0 : index
    %c0_11 = arith.constant 0 : index
    %21 = vector.load %arg10[%c0_9, %c0_10, %c0_11] : memref<1x128x384xbf16, #tpu.memory_space<vmem>>, vector<1x128x384xbf16>
    %22 = vector.shape_cast %21 : vector<1x128x384xbf16> to vector<128x384xbf16>
    %cst_12 = arith.constant dense<0.000000e+00> : vector<16x384xf32>
    %23 = tpu.matmul %20, %22, %cst_12 {dimension_numbers = #tpu.dot_dimension_numbers<[1], [0], [0], [1], [0, 0, 1, 1], [], []>} : vector<16x128xbf16>, vector<128x384xbf16>, vector<16x384xf32> -> vector<16x384xf32>
    %24 = vector.extract_strided_slice %23 {offsets = [0, 0], sizes = [16, 256], strides = [1, 1]} : vector<16x384xf32> to vector<16x256xf32>
    %25 = vector.extract_strided_slice %23 {offsets = [0, 256], sizes = [16, 128], strides = [1, 1]} : vector<16x384xf32> to vector<16x128xf32>
    %26 = arith.truncf %24 : vector<16x256xf32> to vector<16x256xbf16>
    %c0_13 = arith.constant 0 : index
    %c0_14 = arith.constant 0 : index
    %27 = vector.load %arg5[%c0_13, %c0_14] : memref<256x256xbf16, #tpu.memory_space<vmem>>, vector<256x256xbf16>
    %cst_15 = arith.constant dense<0.000000e+00> : vector<16x256xf32>
    %28 = tpu.matmul %26, %27, %cst_15 {dimension_numbers = #tpu.dot_dimension_numbers<[1], [0], [0], [1], [0, 0, 1, 1], [], []>} : vector<16x256xbf16>, vector<256x256xbf16>, vector<16x256xf32> -> vector<16x256xf32>
    %c0_16 = arith.constant 0 : index
    %c0_17 = arith.constant 0 : index
    %29 = vector.load %arg6[%c0_16, %c0_17] : memref<16x256xf32, #tpu.memory_space<vmem>>, vector<16x256xf32>
    %30 = arith.mulf %24, %29 : vector<16x256xf32>
    %c0_18 = arith.constant 0 : index
    %c0_19 = arith.constant 0 : index
    %31 = vector.load %arg7[%c0_18, %c0_19] : memref<16x256xf32, #tpu.memory_space<vmem>>, vector<16x256xf32>
    %32 = arith.mulf %28, %31 : vector<16x256xf32>
    %33 = arith.addf %30, %32 : vector<16x256xf32>
    %34 = vector.extract_strided_slice %33 {offsets = [0, 0], sizes = [16, 128], strides = [1, 1]} : vector<16x256xf32> to vector<16x128xf32>
    %35 = vector.extract_strided_slice %33 {offsets = [0, 128], sizes = [16, 128], strides = [1, 1]} : vector<16x256xf32> to vector<16x128xf32>
    %36 = vector.extract_strided_slice %34 {offsets = [0, 0], sizes = [16, 32], strides = [1, 1]} : vector<16x128xf32> to vector<16x32xf32>
    %37 = arith.truncf %36 : vector<16x32xf32> to vector<16x32xbf16>
    %38 = vector.extract_strided_slice %35 {offsets = [0, 0], sizes = [16, 32], strides = [1, 1]} : vector<16x128xf32> to vector<16x32xf32>
    %39 = arith.truncf %38 : vector<16x32xf32> to vector<16x32xbf16>
    %40 = vector.extract_strided_slice %25 {offsets = [0, 0], sizes = [16, 32], strides = [1, 1]} : vector<16x128xf32> to vector<16x32xf32>
    %41 = arith.truncf %40 : vector<16x32xf32> to vector<16x32xbf16>
    %cst_20 = arith.constant dense<0.000000e+00> : vector<16x16xf32>
    %42 = tpu.matmul %37, %39, %cst_20 {dimension_numbers = #tpu.dot_dimension_numbers<[1], [1], [0], [0], [0, 0, 1, 0], [], []>} : vector<16x32xbf16>, vector<16x32xbf16>, vector<16x16xf32> -> vector<16x16xf32>
    %43 = arith.addf %42, %4 : vector<16x16xf32>
    %cst_21 = arith.constant dense<0xFF800000> : vector<16xf32>
    %44 = vector.multi_reduction <maximumf>, %43, %cst_21 [1] : vector<16x16xf32> to vector<16xf32>
    %45 = vector.shape_cast %44 : vector<16xf32> to vector<16x1xf32>
    %46 = vector.broadcast %45 : vector<16x1xf32> to vector<16x16xf32>
    %47 = arith.subf %43, %46 : vector<16x16xf32>
    %48 = math.exp %47 : vector<16x16xf32>
    %cst_22 = arith.constant dense<0.000000e+00> : vector<16xf32>
    %49 = vector.multi_reduction <add>, %48, %cst_22 [1] : vector<16x16xf32> to vector<16xf32>
    %50 = vector.shape_cast %49 : vector<16xf32> to vector<16x1xf32>
    %51 = tpu.reciprocal %50 {approx = true} : vector<16x1xf32> -> vector<16x1xf32>
    %52 = vector.broadcast %51 : vector<16x1xf32> to vector<16x16xf32>
    %53 = arith.mulf %48, %52 : vector<16x16xf32>
    %54 = arith.truncf %53 : vector<16x16xf32> to vector<16x16xbf16>
    %cst_23 = arith.constant dense<0.000000e+00> : vector<16x32xf32>
    %55 = tpu.matmul %54, %41, %cst_23 {dimension_numbers = #tpu.dot_dimension_numbers<[1], [0], [0], [1], [0, 0, 1, 1], [], []>} : vector<16x16xbf16>, vector<16x32xbf16>, vector<16x32xf32> -> vector<16x32xf32>
    %56 = arith.truncf %55 : vector<16x32xf32> to vector<16x32xbf16>
    %c0_24 = arith.constant 0 : index
    %c0_25 = arith.constant 0 : index
    %57 = vector.load %arg19[%c0_24, %c0_25] : memref<16x128xbf16, #tpu.memory_space<vmem>>, vector<16x32xbf16>
    tpu.vector_store %arg19[%c0_24, %c0_25], %56 {strides = array<i32>} : memref<16x128xbf16, #tpu.memory_space<vmem>>, vector<16x32xbf16>,
    %58 = vector.extract_strided_slice %34 {offsets = [0, 32], sizes = [16, 32], strides = [1, 1]} : vector<16x128xf32> to vector<16x32xf32>
    %59 = arith.truncf %58 : vector<16x32xf32> to vector<16x32xbf16>
    %60 = vector.extract_strided_slice %35 {offsets = [0, 32], sizes = [16, 32], strides = [1, 1]} : vector<16x128xf32> to vector<16x32xf32>
    %61 = arith.truncf %60 : vector<16x32xf32> to vector<16x32xbf16>
    %62 = vector.extract_strided_slice %25 {offsets = [0, 32], sizes = [16, 32], strides = [1, 1]} : vector<16x128xf32> to vector<16x32xf32>
    %63 = arith.truncf %62 : vector<16x32xf32> to vector<16x32xbf16>
    %cst_26 = arith.constant dense<0.000000e+00> : vector<16x16xf32>
    %64 = tpu.matmul %59, %61, %cst_26 {dimension_numbers = #tpu.dot_dimension_numbers<[1], [1], [0], [0], [0, 0, 1, 0], [], []>} : vector<16x32xbf16>, vector<16x32xbf16>, vector<16x16xf32> -> vector<16x16xf32>
    %65 = arith.addf %64, %4 : vector<16x16xf32>
    %cst_27 = arith.constant dense<0xFF800000> : vector<16xf32>
    %66 = vector.multi_reduction <maximumf>, %65, %cst_27 [1] : vector<16x16xf32> to vector<16xf32>
    %67 = vector.shape_cast %66 : vector<16xf32> to vector<16x1xf32>
    %68 = vector.broadcast %67 : vector<16x1xf32> to vector<16x16xf32>
    %69 = arith.subf %65, %68 : vector<16x16xf32>
    %70 = math.exp %69 : vector<16x16xf32>
    %cst_28 = arith.constant dense<0.000000e+00> : vector<16xf32>
    %71 = vector.multi_reduction <add>, %70, %cst_28 [1] : vector<16x16xf32> to vector<16xf32>
    %72 = vector.shape_cast %71 : vector<16xf32> to vector<16x1xf32>
    %73 = tpu.reciprocal %72 {approx = true} : vector<16x1xf32> -> vector<16x1xf32>
    %74 = vector.broadcast %73 : vector<16x1xf32> to vector<16x16xf32>
    %75 = arith.mulf %70, %74 : vector<16x16xf32>
    %76 = arith.truncf %75 : vector<16x16xf32> to vector<16x16xbf16>
    %cst_29 = arith.constant dense<0.000000e+00> : vector<16x32xf32>
    %77 = tpu.matmul %76, %63, %cst_29 {dimension_numbers = #tpu.dot_dimension_numbers<[1], [0], [0], [1], [0, 0, 1, 1], [], []>} : vector<16x16xbf16>, vector<16x32xbf16>, vector<16x32xf32> -> vector<16x32xf32>
    %78 = arith.truncf %77 : vector<16x32xf32> to vector<16x32xbf16>
    %c0_30 = arith.constant 0 : index
    %c32 = arith.constant 32 : index
    %79 = vector.load %arg19[%c0_30, %c32] : memref<16x128xbf16, #tpu.memory_space<vmem>>, vector<16x32xbf16>
    tpu.vector_store %arg19[%c0_30, %c32], %78 {strides = array<i32>} : memref<16x128xbf16, #tpu.memory_space<vmem>>, vector<16x32xbf16>,
    %80 = vector.extract_strided_slice %34 {offsets = [0, 64], sizes = [16, 32], strides = [1, 1]} : vector<16x128xf32> to vector<16x32xf32>
    %81 = arith.truncf %80 : vector<16x32xf32> to vector<16x32xbf16>
    %82 = vector.extract_strided_slice %35 {offsets = [0, 64], sizes = [16, 32], strides = [1, 1]} : vector<16x128xf32> to vector<16x32xf32>
    %83 = arith.truncf %82 : vector<16x32xf32> to vector<16x32xbf16>
    %84 = vector.extract_strided_slice %25 {offsets = [0, 64], sizes = [16, 32], strides = [1, 1]} : vector<16x128xf32> to vector<16x32xf32>
    %85 = arith.truncf %84 : vector<16x32xf32> to vector<16x32xbf16>
    %cst_31 = arith.constant dense<0.000000e+00> : vector<16x16xf32>
    %86 = tpu.matmul %81, %83, %cst_31 {dimension_numbers = #tpu.dot_dimension_numbers<[1], [1], [0], [0], [0, 0, 1, 0], [], []>} : vector<16x32xbf16>, vector<16x32xbf16>, vector<16x16xf32> -> vector<16x16xf32>
    %87 = arith.addf %86, %4 : vector<16x16xf32>
    %cst_32 = arith.constant dense<0xFF800000> : vector<16xf32>
    %88 = vector.multi_reduction <maximumf>, %87, %cst_32 [1] : vector<16x16xf32> to vector<16xf32>
    %89 = vector.shape_cast %88 : vector<16xf32> to vector<16x1xf32>
    %90 = vector.broadcast %89 : vector<16x1xf32> to vector<16x16xf32>
    %91 = arith.subf %87, %90 : vector<16x16xf32>
    %92 = math.exp %91 : vector<16x16xf32>
    %cst_33 = arith.constant dense<0.000000e+00> : vector<16xf32>
    %93 = vector.multi_reduction <add>, %92, %cst_33 [1] : vector<16x16xf32> to vector<16xf32>
    %94 = vector.shape_cast %93 : vector<16xf32> to vector<16x1xf32>
    %95 = tpu.reciprocal %94 {approx = true} : vector<16x1xf32> -> vector<16x1xf32>
    %96 = vector.broadcast %95 : vector<16x1xf32> to vector<16x16xf32>
    %97 = arith.mulf %92, %96 : vector<16x16xf32>
    %98 = arith.truncf %97 : vector<16x16xf32> to vector<16x16xbf16>
    %cst_34 = arith.constant dense<0.000000e+00> : vector<16x32xf32>
    %99 = tpu.matmul %98, %85, %cst_34 {dimension_numbers = #tpu.dot_dimension_numbers<[1], [0], [0], [1], [0, 0, 1, 1], [], []>} : vector<16x16xbf16>, vector<16x32xbf16>, vector<16x32xf32> -> vector<16x32xf32>
    %100 = arith.truncf %99 : vector<16x32xf32> to vector<16x32xbf16>
    %c0_35 = arith.constant 0 : index
    %c64 = arith.constant 64 : index
    %101 = vector.load %arg19[%c0_35, %c64] : memref<16x128xbf16, #tpu.memory_space<vmem>>, vector<16x32xbf16>
    tpu.vector_store %arg19[%c0_35, %c64], %100 {strides = array<i32>} : memref<16x128xbf16, #tpu.memory_space<vmem>>, vector<16x32xbf16>,
    %102 = vector.extract_strided_slice %34 {offsets = [0, 96], sizes = [16, 32], strides = [1, 1]} : vector<16x128xf32> to vector<16x32xf32>
    %103 = arith.truncf %102 : vector<16x32xf32> to vector<16x32xbf16>
    %104 = vector.extract_strided_slice %35 {offsets = [0, 96], sizes = [16, 32], strides = [1, 1]} : vector<16x128xf32> to vector<16x32xf32>
    %105 = arith.truncf %104 : vector<16x32xf32> to vector<16x32xbf16>
    %106 = vector.extract_strided_slice %25 {offsets = [0, 96], sizes = [16, 32], strides = [1, 1]} : vector<16x128xf32> to vector<16x32xf32>
    %107 = arith.truncf %106 : vector<16x32xf32> to vector<16x32xbf16>
    %cst_36 = arith.constant dense<0.000000e+00> : vector<16x16xf32>
    %108 = tpu.matmul %103, %105, %cst_36 {dimension_numbers = #tpu.dot_dimension_numbers<[1], [1], [0], [0], [0, 0, 1, 0], [], []>} : vector<16x32xbf16>, vector<16x32xbf16>, vector<16x16xf32> -> vector<16x16xf32>
    %109 = arith.addf %108, %4 : vector<16x16xf32>
    %cst_37 = arith.constant dense<0xFF800000> : vector<16xf32>
    %110 = vector.multi_reduction <maximumf>, %109, %cst_37 [1] : vector<16x16xf32> to vector<16xf32>
    %111 = vector.shape_cast %110 : vector<16xf32> to vector<16x1xf32>
    %112 = vector.broadcast %111 : vector<16x1xf32> to vector<16x16xf32>
    %113 = arith.subf %109, %112 : vector<16x16xf32>
    %114 = math.exp %113 : vector<16x16xf32>
    %cst_38 = arith.constant dense<0.000000e+00> : vector<16xf32>
    %115 = vector.multi_reduction <add>, %114, %cst_38 [1] : vector<16x16xf32> to vector<16xf32>
    %116 = vector.shape_cast %115 : vector<16xf32> to vector<16x1xf32>
    %117 = tpu.reciprocal %116 {approx = true} : vector<16x1xf32> -> vector<16x1xf32>
    %118 = vector.broadcast %117 : vector<16x1xf32> to vector<16x16xf32>
    %119 = arith.mulf %114, %118 : vector<16x16xf32>
    %120 = arith.truncf %119 : vector<16x16xf32> to vector<16x16xbf16>
    %cst_39 = arith.constant dense<0.000000e+00> : vector<16x32xf32>
    %121 = tpu.matmul %120, %107, %cst_39 {dimension_numbers = #tpu.dot_dimension_numbers<[1], [0], [0], [1], [0, 0, 1, 1], [], []>} : vector<16x16xbf16>, vector<16x32xbf16>, vector<16x32xf32> -> vector<16x32xf32>
    %122 = arith.truncf %121 : vector<16x32xf32> to vector<16x32xbf16>
    %c0_40 = arith.constant 0 : index
    %c96 = arith.constant 96 : index
    %123 = vector.load %arg19[%c0_40, %c96] : memref<16x128xbf16, #tpu.memory_space<vmem>>, vector<16x32xbf16>
    tpu.vector_store %arg19[%c0_40, %c96], %122 {strides = array<i32>} : memref<16x128xbf16, #tpu.memory_space<vmem>>, vector<16x32xbf16>,
    %c0_41 = arith.constant 0 : index
    %c0_42 = arith.constant 0 : index
    %124 = vector.load %arg19[%c0_41, %c0_42] : memref<16x128xbf16, #tpu.memory_space<vmem>>, vector<16x128xbf16>
    %c0_43 = arith.constant 0 : index
    %c0_44 = arith.constant 0 : index
    %c0_45 = arith.constant 0 : index
    %125 = vector.load %arg11[%c0_43, %c0_44, %c0_45] : memref<1x128x128xbf16, #tpu.memory_space<vmem>>, vector<1x128x128xbf16>
    %126 = vector.shape_cast %125 : vector<1x128x128xbf16> to vector<128x128xbf16>
    %cst_46 = arith.constant dense<0.000000e+00> : vector<16x128xf32>
    %127 = tpu.matmul %124, %126, %cst_46 {dimension_numbers = #tpu.dot_dimension_numbers<[1], [0], [0], [1], [0, 0, 1, 1], [], []>} : vector<16x128xbf16>, vector<128x128xbf16>, vector<16x128xf32> -> vector<16x128xf32>
    %128 = arith.addf %3, %127 : vector<16x128xf32>
    %c0_47 = arith.constant 0 : index
    %c0_48 = arith.constant 0 : index
    %c0_49 = arith.constant 0 : index
    %129 = vector.load %arg12[%c0_47, %c0_48, %c0_49] : memref<1x1x128xbf16, #tpu.memory_space<vmem>>, vector<1x1x128xbf16>
    %130 = vector.shape_cast %129 : vector<1x1x128xbf16> to vector<1x128xbf16>
    %131 = arith.extf %130 : vector<1x128xbf16> to vector<1x128xf32>
    %132 = arith.mulf %128, %128 : vector<16x128xf32>
    %cst_50 = arith.constant dense<0.000000e+00> : vector<16xf32>
    %133 = vector.multi_reduction <add>, %132, %cst_50 [1] : vector<16x128xf32> to vector<16xf32>
    %134 = vector.shape_cast %133 : vector<16xf32> to vector<16x1xf32>
    %cst_51 = arith.constant 1.280000e+02 : f32
    %135 = vector.broadcast %cst_51 : f32 to vector<16x1xf32>
    %136 = arith.divf %134, %135 : vector<16x1xf32>
    %cst_52 = arith.constant 9.99999997E-7 : f32
    %137 = vector.broadcast %cst_52 : f32 to vector<16x1xf32>
    %138 = arith.addf %136, %137 : vector<16x1xf32>
    %139 = math.rsqrt %138 : vector<16x1xf32>
    %140 = vector.broadcast %139 : vector<16x1xf32> to vector<16x128xf32>
    %141 = arith.mulf %128, %140 : vector<16x128xf32>
    %142 = vector.broadcast %131 : vector<1x128xf32> to vector<16x128xf32>
    %143 = arith.mulf %141, %142 : vector<16x128xf32>
    %144 = arith.truncf %143 : vector<16x128xf32> to vector<16x128xbf16>
    %c0_53 = arith.constant 0 : index
    %c0_54 = arith.constant 0 : index
    %c0_55 = arith.constant 0 : index
    %145 = vector.load %arg13[%c0_53, %c0_54, %c0_55] : memref<1x128x512xbf16, #tpu.memory_space<vmem>>, vector<1x128x512xbf16>
    %146 = vector.shape_cast %145 : vector<1x128x512xbf16> to vector<128x512xbf16>
    %cst_56 = arith.constant dense<0.000000e+00> : vector<16x512xf32>
    %147 = tpu.matmul %144, %146, %cst_56 {dimension_numbers = #tpu.dot_dimension_numbers<[1], [0], [0], [1], [0, 0, 1, 1], [], []>} : vector<16x128xbf16>, vector<128x512xbf16>, vector<16x512xf32> -> vector<16x512xf32>
    %148 = vector.extract_strided_slice %147 {offsets = [0, 0], sizes = [16, 256], strides = [1, 1]} : vector<16x512xf32> to vector<16x256xf32>
    %149 = vector.extract_strided_slice %147 {offsets = [0, 256], sizes = [16, 256], strides = [1, 1]} : vector<16x512xf32> to vector<16x256xf32>
    %150 = arith.negf %148 : vector<16x256xf32>
    %151 = math.exp %150 : vector<16x256xf32>
    %cst_57 = arith.constant 1.000000e+00 : f32
    %152 = vector.broadcast %cst_57 : f32 to vector<16x256xf32>
    %153 = arith.addf %152, %151 : vector<16x256xf32>
    %154 = arith.divf %152, %153 : vector<16x256xf32>
    %155 = arith.mulf %148, %154 : vector<16x256xf32>
    %156 = arith.mulf %155, %149 : vector<16x256xf32>
    %157 = arith.truncf %156 : vector<16x256xf32> to vector<16x256xbf16>
    %c0_58 = arith.constant 0 : index
    %c0_59 = arith.constant 0 : index
    %c0_60 = arith.constant 0 : index
    %158 = vector.load %arg14[%c0_58, %c0_59, %c0_60] : memref<1x256x128xbf16, #tpu.memory_space<vmem>>, vector<1x256x128xbf16>
    %159 = vector.shape_cast %158 : vector<1x256x128xbf16> to vector<256x128xbf16>
    %cst_61 = arith.constant dense<0.000000e+00> : vector<16x128xf32>
    %160 = tpu.matmul %157, %159, %cst_61 {dimension_numbers = #tpu.dot_dimension_numbers<[1], [0], [0], [1], [0, 0, 1, 1], [], []>} : vector<16x256xbf16>, vector<256x128xbf16>, vector<16x128xf32> -> vector<16x128xf32>
    %161 = arith.addf %128, %160 : vector<16x128xf32>
    %c0_62 = arith.constant 0 : index
    %c0_63 = arith.constant 0 : index
    %162 = vector.load %arg18[%c0_62, %c0_63] : memref<16x128xf32, #tpu.memory_space<vmem>>, vector<16x128xf32>
    tpu.vector_store %arg18[%c0_62, %c0_63], %161 {strides = array<i32>} : memref<16x128xf32, #tpu.memory_space<vmem>>, vector<16x128xf32>,
    %c1_i32 = arith.constant 1 : i32
    %163 = arith.cmpi eq, %arg1, %c1_i32 : i32
    %164 = arith.extui %163 : i1 to i32
    %c0_i32_64 = arith.constant 0 : i32
    %165 = arith.cmpi ne, %164, %c0_i32_64 : i32
    scf.if %165 {
      %c0_65 = arith.constant 0 : index
      %c0_66 = arith.constant 0 : index
      %166 = vector.load %arg15[%c0_65, %c0_66] : memref<1x128xbf16, #tpu.memory_space<vmem>>, vector<1x128xbf16>
      %167 = arith.extf %166 : vector<1x128xbf16> to vector<1x128xf32>
      %168 = arith.mulf %161, %161 : vector<16x128xf32>
      %cst_67 = arith.constant dense<0.000000e+00> : vector<16xf32>
      %169 = vector.multi_reduction <add>, %168, %cst_67 [1] : vector<16x128xf32> to vector<16xf32>
      %170 = vector.shape_cast %169 : vector<16xf32> to vector<16x1xf32>
      %cst_68 = arith.constant 1.280000e+02 : f32
      %171 = vector.broadcast %cst_68 : f32 to vector<16x1xf32>
      %172 = arith.divf %170, %171 : vector<16x1xf32>
      %cst_69 = arith.constant 9.99999997E-7 : f32
      %173 = vector.broadcast %cst_69 : f32 to vector<16x1xf32>
      %174 = arith.addf %172, %173 : vector<16x1xf32>
      %175 = math.rsqrt %174 : vector<16x1xf32>
      %176 = vector.broadcast %175 : vector<16x1xf32> to vector<16x128xf32>
      %177 = arith.mulf %161, %176 : vector<16x128xf32>
      %178 = vector.broadcast %167 : vector<1x128xf32> to vector<16x128xf32>
      %179 = arith.mulf %177, %178 : vector<16x128xf32>
      %180 = arith.truncf %179 : vector<16x128xf32> to vector<16x128xbf16>
      %c0_70 = arith.constant 0 : index
      %c0_71 = arith.constant 0 : index
      %181 = vector.load %arg16[%c0_70, %c0_71] : memref<128x256xbf16, #tpu.memory_space<vmem>>, vector<128x256xbf16>
      %cst_72 = arith.constant dense<0.000000e+00> : vector<16x256xf32>
      %182 = tpu.matmul %180, %181, %cst_72 {dimension_numbers = #tpu.dot_dimension_numbers<[1], [0], [0], [1], [0, 0, 1, 1], [], []>} : vector<16x128xbf16>, vector<128x256xbf16>, vector<16x256xf32> -> vector<16x256xf32>
      %183 = vector.extract_strided_slice %182 {offsets = [11, 0], sizes = [1, 256], strides = [1, 1]} : vector<16x256xf32> to vector<1x256xf32>
      %c0_73 = arith.constant 0 : index
      %c0_74 = arith.constant 0 : index
      %c0_75 = arith.constant 0 : index
      %184 = vector.load %arg17[%c0_73, %c0_74, %c0_75] : memref<1x1x256xf32, #tpu.memory_space<vmem>>, vector<1x1x256xf32>
      %185 = vector.shape_cast %184 : vector<1x1x256xf32> to vector<1x256xf32>
      %186 = vector.shape_cast %183 : vector<1x256xf32> to vector<1x1x256xf32>
      tpu.vector_store %arg17[%c0_73, %c0_74, %c0_75], %186 {strides = array<i32>} : memref<1x1x256xf32, #tpu.memory_space<vmem>>, vector<1x1x256xf32>,
    } else {
    }
    return
  }
  func.func @transform_0(%arg0: i32, %arg1: i32) -> (i32, i32, i32) {
    %c0_i32 = arith.constant 0 : i32
    %c0_i32_0 = arith.constant 0 : i32
    %c0_i32_1 = arith.constant 0 : i32
    return %arg0, %c0_i32, %c0_i32_0 : i32, i32, i32
  }
  func.func @transform_1(%arg0: i32, %arg1: i32) -> (i32, i32, i32) {
    %c0_i32 = arith.constant 0 : i32
    %c0_i32_0 = arith.constant 0 : i32
    %c0_i32_1 = arith.constant 0 : i32
    return %arg0, %c0_i32, %c0_i32_0 : i32, i32, i32
  }
  func.func @transform_2(%arg0: i32, %arg1: i32) -> (i32, i32) {
    %c0_i32 = arith.constant 0 : i32
    %c0_i32_0 = arith.constant 0 : i32
    %c0_i32_1 = arith.constant 0 : i32
    return %c0_i32, %c0_i32_0 : i32, i32
  }
  func.func @transform_3(%arg0: i32, %arg1: i32) -> (i32, i32) {
    %c0_i32 = arith.constant 0 : i32
    %c0_i32_0 = arith.constant 0 : i32
    %c0_i32_1 = arith.constant 0 : i32
    return %c0_i32, %c0_i32_0 : i32, i32
  }
  func.func @transform_4(%arg0: i32, %arg1: i32) -> (i32, i32) {
    %c0_i32 = arith.constant 0 : i32
    %c0_i32_0 = arith.constant 0 : i32
    %c0_i32_1 = arith.constant 0 : i32
    return %c0_i32, %c0_i32_0 : i32, i32
  }
  func.func @transform_5(%arg0: i32, %arg1: i32) -> (i32, i32) {
    %c0_i32 = arith.constant 0 : i32
    %c0_i32_0 = arith.constant 0 : i32
    %c0_i32_1 = arith.constant 0 : i32
    return %c0_i32, %c0_i32_0 : i32, i32
  }
  func.func @transform_6(%arg0: i32, %arg1: i32) -> (i32, i32) {
    %c0_i32 = arith.constant 0 : i32
    %c0_i32_0 = arith.constant 0 : i32
    %c0_i32_1 = arith.constant 0 : i32
    return %c0_i32, %c0_i32_0 : i32, i32
  }
  func.func @transform_7(%arg0: i32, %arg1: i32) -> (i32, i32, i32) {
    %c0_i32 = arith.constant 0 : i32
    %c0_i32_0 = arith.constant 0 : i32
    %c0_i32_1 = arith.constant 0 : i32
    return %arg1, %c0_i32, %c0_i32_0 : i32, i32, i32
  }
  func.func @transform_8(%arg0: i32, %arg1: i32) -> (i32, i32, i32) {
    %c0_i32 = arith.constant 0 : i32
    %c0_i32_0 = arith.constant 0 : i32
    %c0_i32_1 = arith.constant 0 : i32
    return %arg1, %c0_i32, %c0_i32_0 : i32, i32, i32
  }
  func.func @transform_9(%arg0: i32, %arg1: i32) -> (i32, i32, i32) {
    %c0_i32 = arith.constant 0 : i32
    %c0_i32_0 = arith.constant 0 : i32
    %c0_i32_1 = arith.constant 0 : i32
    return %arg1, %c0_i32, %c0_i32_0 : i32, i32, i32
  }
  func.func @transform_10(%arg0: i32, %arg1: i32) -> (i32, i32, i32) {
    %c0_i32 = arith.constant 0 : i32
    %c0_i32_0 = arith.constant 0 : i32
    %c0_i32_1 = arith.constant 0 : i32
    return %arg1, %c0_i32, %c0_i32_0 : i32, i32, i32
  }
  func.func @transform_11(%arg0: i32, %arg1: i32) -> (i32, i32, i32) {
    %c0_i32 = arith.constant 0 : i32
    %c0_i32_0 = arith.constant 0 : i32
    %c0_i32_1 = arith.constant 0 : i32
    return %arg1, %c0_i32, %c0_i32_0 : i32, i32, i32
  }
  func.func @transform_12(%arg0: i32, %arg1: i32) -> (i32, i32, i32) {
    %c0_i32 = arith.constant 0 : i32
    %c0_i32_0 = arith.constant 0 : i32
    %c0_i32_1 = arith.constant 0 : i32
    return %arg1, %c0_i32, %c0_i32_0 : i32, i32, i32
  }
  func.func @transform_13(%arg0: i32, %arg1: i32) -> (i32, i32) {
    %c0_i32 = arith.constant 0 : i32
    %c0_i32_0 = arith.constant 0 : i32
    %c0_i32_1 = arith.constant 0 : i32
    return %c0_i32, %c0_i32_0 : i32, i32
  }
  func.func @transform_14(%arg0: i32, %arg1: i32) -> (i32, i32) {
    %c0_i32 = arith.constant 0 : i32
    %c0_i32_0 = arith.constant 0 : i32
    %c0_i32_1 = arith.constant 0 : i32
    return %c0_i32, %c0_i32_0 : i32, i32
  }
  func.func @transform_15(%arg0: i32, %arg1: i32) -> (i32, i32, i32) {
    %c0_i32 = arith.constant 0 : i32
    %c0_i32_0 = arith.constant 0 : i32
    %c0_i32_1 = arith.constant 0 : i32
    return %arg0, %c0_i32, %c0_i32_0 : i32, i32, i32
  }
}

</mosaic_0001>

<llo_original>
// kernel: owl3_logits_forward.1
$region0: #{owl3_logits_forward.1}
  #allocation0 [shape = 'u32[]', space=smem, size = 0x4, offset = 0x4, fixed_abs, tag = 'smem constant byte address 0x4 - core index']
  #allocation1 [shape = 'u32[72,128]{1,0:T(1,128)}', space=vmem, size = 0x9000, scoped, tag = 'internal scratch']
  #allocation2 [shape = 'f32[16,128]{1,0:T(8,128)}', space=vmem, size = 0x2000, scoped, tag = 'scratch operand']
  #allocation3 [shape = 'bf16[16,128]{1,0:T(8,128)(2,1)}', space=vmem, size = 0x1000, scoped, tag = 'scratch operand']
  %s0 = inlined_call_operand.vmem [shape: bf16[2,16,192], index: 0, kind: input, shape index: {}]
  %s1 = inlined_call_operand.vmem [shape: f32[2,16,128], index: 1, kind: input, shape index: {}]
  %s2 = inlined_call_operand.vmem [shape: bf16[192,128], index: 2, kind: input, shape index: {}]
  %s3 = inlined_call_operand.hbm [shape: bf16[256,256], index: 3, kind: input, shape index: {}]
  %s4 = inlined_call_operand.vmem [shape: f32[16,256], index: 4, kind: input, shape index: {}]
  %s5 = inlined_call_operand.vmem [shape: f32[16,256], index: 5, kind: input, shape index: {}]
  %s6 = inlined_call_operand.vmem [shape: f32[16,16], index: 6, kind: input, shape index: {}]
  %s7 = inlined_call_operand.vmem [shape: bf16[2,1,128], index: 7, kind: input, shape index: {}]
  %s8 = inlined_call_operand.vmem [shape: bf16[2,128,384], index: 8, kind: input, shape index: {}]
  %s9 = inlined_call_operand.vmem [shape: bf16[2,128,128], index: 9, kind: input, shape index: {}]
  %s10 = inlined_call_operand.vmem [shape: bf16[2,1,128], index: 10, kind: input, shape index: {}]
  %s11 = inlined_call_operand.vmem [shape: bf16[2,128,512], index: 11, kind: input, shape index: {}]
  %s12 = inlined_call_operand.hbm [shape: bf16[2,256,128], index: 12, kind: input, shape index: {}]
  %s13 = inlined_call_operand.vmem [shape: bf16[1,128], index: 13, kind: input, shape index: {}]
  %s14 = inlined_call_operand.vmem [shape: bf16[128,256], index: 14, kind: input, shape index: {}]
  %s15 = inlined_call_operand.vmem [shape: f32[2,1,256], index: 15, kind: output, shape index: {}]
  %s16 = sld [smem:[#allocation0]]
  $region109: #{owl3_logits_forward.1} parent=0
    _
  %s18 = ssub.s32 1, %s16
  %s19 = scalar_select 0, %s18, %s16
  $region1: #{owl3_logits_forward.1} parent=0
    #allocation4 [shape = 'u8[131072]{0}', space=vmem, size = 0x20000, scoped, tag = 'input window, operand 3, single buffered']
    #allocation5 [shape = 's32[2]{0}', space=sflag, size = 0x8, scoped, tag = 'scoped memory for owl3_logits_forward.1']
    #allocation6 [shape = 'u8[131072]{0}', space=vmem, size = 0x20000, scoped, tag = 'input window, operand 12']
    #allocation7 [shape = 's32[2]{0}', space=sflag, size = 0x8, scoped, tag = 'scoped memory for owl3_logits_forward.1']
    %20 = vsyncpa [#allocation5], 0
    %21 = vsyncpa [#allocation7], 0
    %s22 = scalar_lea.sflag [#allocation7], 1
    %23 = vsyncpa %s22, 0
    loop: start=0, step=1, limit=6
    $region2: #{owl3_logits_forward.1} parent=1 // loop_pre_header
      _
    $region3: #{owl3_logits_forward.1} parent=1 // loop_header
      %s25 = sphi 0, %s29
      %p26 = scmp.ge.s32.totalorder %s25, 6
      %s32 = sphi 0, %s44
      %s33 = sphi 0, %s40
      %s34 = sphi 0, %s32
      %s35 = sphi 0, %s33
      %s36 = sphi 0, %s34
      %s37 = sphi 0, %s35
      %s47 = sphi 0, %s49
      %s50 = sphi 0, %s47
      %s51 = sphi 0, %s50
      %s67 = sphi 0, %s51
      %s73 = sphi 0, %s75
      %s76 = sphi 0, %s73
      %s77 = sphi 0, %s76
      %s93 = sphi 0, %s77
      %s97 = sphi 0, %s97
      %s99 = sphi 0, %s97
      %s100 = sphi 0, %s99
      %s114 = sphi 0, %s100
      %s118 = sphi 0, %s118
      %s120 = sphi 0, %s118
      %s121 = sphi 0, %s120
      %s135 = sphi 0, %s121
      %s139 = sphi 0, %s139
      %s141 = sphi 0, %s139
      %s142 = sphi 0, %s141
      %s156 = sphi 0, %s142
      %s160 = sphi 0, %s160
      %s162 = sphi 0, %s160
      %s163 = sphi 0, %s162
      %s177 = sphi 0, %s163
      %s181 = sphi 0, %s181
      %s183 = sphi 0, %s181
      %s184 = sphi 0, %s183
      %s198 = sphi 0, %s184
      %s204 = sphi 0, %s206
      %s207 = sphi 0, %s204
      %s208 = sphi 0, %s207
      %s224 = sphi 0, %s208
      %s230 = sphi 0, %s232
      %s233 = sphi 0, %s230
      %s234 = sphi 0, %s233
      %s250 = sphi 0, %s234
      %s256 = sphi 0, %s258
      %s259 = sphi 0, %s256
      %s260 = sphi 0, %s259
      %s276 = sphi 0, %s260
      %s282 = sphi 0, %s284
      %s285 = sphi 0, %s282
      %s286 = sphi 0, %s285
      %s302 = sphi 0, %s286
      %s308 = sphi 0, %s310
      %s311 = sphi 0, %s308
      %s312 = sphi 0, %s311
      %s328 = sphi 0, %s312
      %s334 = sphi 0, %s336
      %s337 = sphi 0, %s334
      %s338 = sphi 0, %s337
      %s354 = sphi 0, %s338
      %s358 = sphi 0, %s358
      %s360 = sphi 0, %s358
      %s361 = sphi 0, %s360
      %s375 = sphi 0, %s361
      %s379 = sphi 0, %s379
      %s381 = sphi 0, %s379
      %s382 = sphi 0, %s381
      %s396 = sphi 0, %s382
      %s402 = sphi 0, %s404
      %s405 = sphi 0, %s402
      %s406 = sphi 0, %s405
      %s422 = sphi 0, %s406
    $region4: #{owl3_logits_forward.1} parent=1 // loop_header_branch
      %28 = sbr.rel (%p26) target = $region8
    $region5: #{owl3_logits_forward.1} parent=1 // loop_body
      %s30 = ssub.s32 %s25, 1
      %s31 = ssub.s32 %s25, 2
      %s38 = sadd.s32 1, %s33
      %p39 = scmp.ge.s32.totalorder %s38, 2
      %s40 = scalar_select %p39, 0, %s38
      %s41 = sadd.s32 1, %s32
      %s42 = scalar_select %p39, %s41, %s32
      %p43 = scmp.ge.s32.totalorder %s42, 2
      %s44 = scalar_select %p43, 0, %s42
      %s45 = ssub.s32 %s32, %s44
      %p46 = scmp.eq.s32.totalorder %s45, 0
      %s48 = sadd.s32 %s47, 1
      %s49 = scalar_select %p46, %s47, %s48
      %p52 = pneg %p46
      %p53 = scmp.eq.s32.totalorder %s25, 3
      %p54 = por %p52, %p53
      %p55 = scmp.ne.s32.totalorder %s47, %s50
      %p56 = scmp.eq.s32.totalorder %s25, 0
      %p57 = por %p55, %p56
      %p58 = scmp.ne.s32.totalorder %s47, %s50
      %p59 = scmp.eq.s32.totalorder %s30, 3
      %p60 = por %p58, %p59
      %p61 = scmp.ne.s32.totalorder %s50, %s51
      %p62 = scmp.eq.s32.totalorder %s30, 0
      %p63 = por %p61, %p62
      %p64 = scmp.ne.s32.totalorder %s50, %s51
      %p65 = scmp.eq.s32.totalorder %s31, 3
      %p66 = por %p64, %p65
      %p68 = scmp.ne.s32.totalorder %s51, %s67
      %p69 = scmp.eq.s32.totalorder %s31, 0
      %p70 = por %p68, %p69
      %s71 = ssub.s32 %s32, %s44
      %p72 = scmp.eq.s32.totalorder %s71, 0
      %s74 = sadd.s32 %s73, 1
      %s75 = scalar_select %p72, %s73, %s74
      %p78 = pneg %p72
      %p79 = scmp.eq.s32.totalorder %s25, 3
      %p80 = por %p78, %p79
      %p81 = scmp.ne.s32.totalorder %s73, %s76
      %p82 = scmp.eq.s32.totalorder %s25, 0
      %p83 = por %p81, %p82
      %p84 = scmp.ne.s32.totalorder %s73, %s76
      %p85 = scmp.eq.s32.totalorder %s30, 3
      %p86 = por %p84, %p85
      %p87 = scmp.ne.s32.totalorder %s76, %s77
      %p88 = scmp.eq.s32.totalorder %s30, 0
      %p89 = por %p87, %p88
      %p90 = scmp.ne.s32.totalorder %s76, %s77
      %p91 = scmp.eq.s32.totalorder %s31, 3
      %p92 = por %p90, %p91
      %p94 = scmp.ne.s32.totalorder %s77, %s93
      %p95 = scmp.eq.s32.totalorder %s31, 0
      %p96 = por %p94, %p95
      %s98 = sadd.s32 %s97, 1
      %p101 = scmp.eq.s32.totalorder %s25, 3
      %p102 = scmp.ne.s32.totalorder %s97, %s99
      %p103 = scmp.eq.s32.totalorder %s25, 0
      %p104 = por %p102, %p103
      %p105 = scmp.ne.s32.totalorder %s97, %s99
      %p106 = scmp.eq.s32.totalorder %s30, 3
      %p107 = por %p105, %p106
      %p108 = scmp.ne.s32.totalorder %s99, %s100
      %p109 = scmp.eq.s32.totalorder %s30, 0
      %p110 = por %p108, %p109
      %p111 = scmp.ne.s32.totalorder %s99, %s100
      %p112 = scmp.eq.s32.totalorder %s31, 3
      %p113 = por %p111, %p112
      %p115 = scmp.ne.s32.totalorder %s100, %s114
      %p116 = scmp.eq.s32.totalorder %s31, 0
      %p117 = por %p115, %p116
      %s119 = sadd.s32 %s118, 1
      %p122 = scmp.eq.s32.totalorder %s25, 3
      %p123 = scmp.ne.s32.totalorder %s118, %s120
      %p124 = scmp.eq.s32.totalorder %s25, 0
      %p125 = por %p123, %p124
      %p126 = scmp.ne.s32.totalorder %s118, %s120
      %p127 = scmp.eq.s32.totalorder %s30, 3
      %p128 = por %p126, %p127
      %p129 = scmp.ne.s32.totalorder %s120, %s121
      %p130 = scmp.eq.s32.totalorder %s30, 0
      %p131 = por %p129, %p130
      %p132 = scmp.ne.s32.totalorder %s120, %s121
      %p133 = scmp.eq.s32.totalorder %s31, 3
      %p134 = por %p132, %p133
      %p136 = scmp.ne.s32.totalorder %s121, %s135
      %p137 = scmp.eq.s32.totalorder %s31, 0
      %p138 = por %p136, %p137
      %s140 = sadd.s32 %s139, 1
      %p143 = scmp.eq.s32.totalorder %s25, 3
      %p144 = scmp.ne.s32.totalorder %s139, %s141
      %p145 = scmp.eq.s32.totalorder %s25, 0
      %p146 = por %p144, %p145
      %p147 = scmp.ne.s32.totalorder %s139, %s141
      %p148 = scmp.eq.s32.totalorder %s30, 3
      %p149 = por %p147, %p148
      %p150 = scmp.ne.s32.totalorder %s141, %s142
      %p151 = scmp.eq.s32.totalorder %s30, 0
      %p152 = por %p150, %p151
      %p153 = scmp.ne.s32.totalorder %s141, %s142
      %p154 = scmp.eq.s32.totalorder %s31, 3
      %p155 = por %p153, %p154
      %p157 = scmp.ne.s32.totalorder %s142, %s156
      %p158 = scmp.eq.s32.totalorder %s31, 0
      %p159 = por %p157, %p158
      %s161 = sadd.s32 %s160, 1
      %p164 = scmp.eq.s32.totalorder %s25, 3
      %p165 = scmp.ne.s32.totalorder %s160, %s162
      %p166 = scmp.eq.s32.totalorder %s25, 0
      %p167 = por %p165, %p166
      %p168 = scmp.ne.s32.totalorder %s160, %s162
      %p169 = scmp.eq.s32.totalorder %s30, 3
      %p170 = por %p168, %p169
      %p171 = scmp.ne.s32.totalorder %s162, %s163
      %p172 = scmp.eq.s32.totalorder %s30, 0
      %p173 = por %p171, %p172
      %p174 = scmp.ne.s32.totalorder %s162, %s163
      %p175 = scmp.eq.s32.totalorder %s31, 3
      %p176 = por %p174, %p175
      %p178 = scmp.ne.s32.totalorder %s163, %s177
      %p179 = scmp.eq.s32.totalorder %s31, 0
      %p180 = por %p178, %p179
      %s182 = sadd.s32 %s181, 1
      %p185 = scmp.eq.s32.totalorder %s25, 3
      %p186 = scmp.ne.s32.totalorder %s181, %s183
      %p187 = scmp.eq.s32.totalorder %s25, 0
      %p188 = por %p186, %p187
      %p189 = scmp.ne.s32.totalorder %s181, %s183
      %p190 = scmp.eq.s32.totalorder %s30, 3
      %p191 = por %p189, %p190
      %p192 = scmp.ne.s32.totalorder %s183, %s184
      %p193 = scmp.eq.s32.totalorder %s30, 0
      %p194 = por %p192, %p193
      %p195 = scmp.ne.s32.totalorder %s183, %s184
      %p196 = scmp.eq.s32.totalorder %s31, 3
      %p197 = por %p195, %p196
      %p199 = scmp.ne.s32.totalorder %s184, %s198
      %p200 = scmp.eq.s32.totalorder %s31, 0
      %p201 = por %p199, %p200
      %s202 = ssub.s32 %s33, %s40
      %p203 = scmp.eq.s32.totalorder %s202, 0
      %s205 = sadd.s32 %s204, 1
      %s206 = scalar_select %p203, %s204, %s205
      %p209 = pneg %p203
      %p210 = scmp.eq.s32.totalorder %s25, 3
      %p211 = por %p209, %p210
      %p212 = scmp.ne.s32.totalorder %s204, %s207
      %p213 = scmp.eq.s32.totalorder %s25, 0
      %p214 = por %p212, %p213
      %p215 = scmp.ne.s32.totalorder %s204, %s207
      %p216 = scmp.eq.s32.totalorder %s30, 3
      %p217 = por %p215, %p216
      %p218 = scmp.ne.s32.totalorder %s207, %s208
      %p219 = scmp.eq.s32.totalorder %s30, 0
      %p220 = por %p218, %p219
      %p221 = scmp.ne.s32.totalorder %s207, %s208
      %p222 = scmp.eq.s32.totalorder %s31, 3
      %p223 = por %p221, %p222
      %p225 = scmp.ne.s32.totalorder %s208, %s224
      %p226 = scmp.eq.s32.totalorder %s31, 0
      %p227 = por %p225, %p226
      %s228 = ssub.s32 %s33, %s40
      %p229 = scmp.eq.s32.totalorder %s228, 0
      %s231 = sadd.s32 %s230, 1
      %s232 = scalar_select %p229, %s230, %s231
      %p235 = pneg %p229
      %p236 = scmp.eq.s32.totalorder %s25, 3
      %p237 = por %p235, %p236
      %p238 = scmp.ne.s32.totalorder %s230, %s233
      %p239 = scmp.eq.s32.totalorder %s25, 0
      %p240 = por %p238, %p239
      %p241 = scmp.ne.s32.totalorder %s230, %s233
      %p242 = scmp.eq.s32.totalorder %s30, 3
      %p243 = por %p241, %p242
      %p244 = scmp.ne.s32.totalorder %s233, %s234
      %p245 = scmp.eq.s32.totalorder %s30, 0
      %p246 = por %p244, %p245
      %p247 = scmp.ne.s32.totalorder %s233, %s234
      %p248 = scmp.eq.s32.totalorder %s31, 3
      %p249 = por %p247, %p248
      %p251 = scmp.ne.s32.totalorder %s234, %s250
      %p252 = scmp.eq.s32.totalorder %s31, 0
      %p253 = por %p251, %p252
      %s254 = ssub.s32 %s33, %s40
      %p255 = scmp.eq.s32.totalorder %s254, 0
      %s257 = sadd.s32 %s256, 1
      %s258 = scalar_select %p255, %s256, %s257
      %p261 = pneg %p255
      %p262 = scmp.eq.s32.totalorder %s25, 3
      %p263 = por %p261, %p262
      %p264 = scmp.ne.s32.totalorder %s256, %s259
      %p265 = scmp.eq.s32.totalorder %s25, 0
      %p266 = por %p264, %p265
      %p267 = scmp.ne.s32.totalorder %s256, %s259
      %p268 = scmp.eq.s32.totalorder %s30, 3
      %p269 = por %p267, %p268
      %p270 = scmp.ne.s32.totalorder %s259, %s260
      %p271 = scmp.eq.s32.totalorder %s30, 0
      %p272 = por %p270, %p271
      %p273 = scmp.ne.s32.totalorder %s259, %s260
      %p274 = scmp.eq.s32.totalorder %s31, 3
      %p275 = por %p273, %p274
      %p277 = scmp.ne.s32.totalorder %s260, %s276
      %p278 = scmp.eq.s32.totalorder %s31, 0
      %p279 = por %p277, %p278
      %s280 = ssub.s32 %s33, %s40
      %p281 = scmp.eq.s32.totalorder %s280, 0
      %s283 = sadd.s32 %s282, 1
      %s284 = scalar_select %p281, %s282, %s283
      %p287 = pneg %p281
      %p288 = scmp.eq.s32.totalorder %s25, 3
      %p289 = por %p287, %p288
      %p290 = scmp.ne.s32.totalorder %s282, %s285
      %p291 = scmp.eq.s32.totalorder %s25, 0
      %p292 = por %p290, %p291
      %p293 = scmp.ne.s32.totalorder %s282, %s285
      %p294 = scmp.eq.s32.totalorder %s30, 3
      %p295 = por %p293, %p294
      %p296 = scmp.ne.s32.totalorder %s285, %s286
      %p297 = scmp.eq.s32.totalorder %s30, 0
      %p298 = por %p296, %p297
      %p299 = scmp.ne.s32.totalorder %s285, %s286
      %p300 = scmp.eq.s32.totalorder %s31, 3
      %p301 = por %p299, %p300
      %p303 = scmp.ne.s32.totalorder %s286, %s302
      %p304 = scmp.eq.s32.totalorder %s31, 0
      %p305 = por %p303, %p304
      %s306 = ssub.s32 %s33, %s40
      %p307 = scmp.eq.s32.totalorder %s306, 0
      %s309 = sadd.s32 %s308, 1
      %s310 = scalar_select %p307, %s308, %s309
      %p313 = pneg %p307
      %p314 = scmp.eq.s32.totalorder %s25, 3
      %p315 = por %p313, %p314
      %p316 = scmp.ne.s32.totalorder %s308, %s311
      %p317 = scmp.eq.s32.totalorder %s25, 0
      %p318 = por %p316, %p317
      %p319 = scmp.ne.s32.totalorder %s308, %s311
      %p320 = scmp.eq.s32.totalorder %s30, 3
      %p321 = por %p319, %p320
      %p322 = scmp.ne.s32.totalorder %s311, %s312
      %p323 = scmp.eq.s32.totalorder %s30, 0
      %p324 = por %p322, %p323
      %p325 = scmp.ne.s32.totalorder %s311, %s312
      %p326 = scmp.eq.s32.totalorder %s31, 3
      %p327 = por %p325, %p326
      %p329 = scmp.ne.s32.totalorder %s312, %s328
      %p330 = scmp.eq.s32.totalorder %s31, 0
      %p331 = por %p329, %p330
      %s332 = ssub.s32 %s33, %s40
      %p333 = scmp.eq.s32.totalorder %s332, 0
      %s335 = sadd.s32 %s334, 1
      %s336 = scalar_select %p333, %s334, %s335
      %p339 = pneg %p333
      %p340 = scmp.eq.s32.totalorder %s25, 3
      %p341 = por %p339, %p340
      %p342 = scmp.ne.s32.totalorder %s334, %s337
      %p343 = scmp.eq.s32.totalorder %s25, 0
      %p344 = por %p342, %p343
      %p345 = scmp.ne.s32.totalorder %s334, %s337
      %p346 = scmp.eq.s32.totalorder %s30, 3
      %p347 = por %p345, %p346
      %p348 = scmp.ne.s32.totalorder %s337, %s338
      %p349 = scmp.eq.s32.totalorder %s30, 0
      %p350 = por %p348, %p349
      %p351 = scmp.ne.s32.totalorder %s337, %s338
      %p352 = scmp.eq.s32.totalorder %s31, 3
      %p353 = por %p351, %p352
      %p355 = scmp.ne.s32.totalorder %s338, %s354
      %p356 = scmp.eq.s32.totalorder %s31, 0
      %p357 = por %p355, %p356
      %s359 = sadd.s32 %s358, 1
      %p362 = scmp.eq.s32.totalorder %s25, 3
      %p363 = scmp.ne.s32.totalorder %s358, %s360
      %p364 = scmp.eq.s32.totalorder %s25, 0
      %p365 = por %p363, %p364
      %p366 = scmp.ne.s32.totalorder %s358, %s360
      %p367 = scmp.eq.s32.totalorder %s30, 3
      %p368 = por %p366, %p367
      %p369 = scmp.ne.s32.totalorder %s360, %s361
      %p370 = scmp.eq.s32.totalorder %s30, 0
      %p371 = por %p369, %p370
      %p372 = scmp.ne.s32.totalorder %s360, %s361
      %p373 = scmp.eq.s32.totalorder %s31, 3
      %p374 = por %p372, %p373
      %p376 = scmp.ne.s32.totalorder %s361, %s375
      %p377 = scmp.eq.s32.totalorder %s31, 0
      %p378 = por %p376, %p377
      %s380 = sadd.s32 %s379, 1
      %p383 = scmp.eq.s32.totalorder %s25, 3
      %p384 = scmp.ne.s32.totalorder %s379, %s381
      %p385 = scmp.eq.s32.totalorder %s25, 0
      %p386 = por %p384, %p385
      %p387 = scmp.ne.s32.totalorder %s379, %s381
      %p388 = scmp.eq.s32.totalorder %s30, 3
      %p389 = por %p387, %p388
      %p390 = scmp.ne.s32.totalorder %s381, %s382
      %p391 = scmp.eq.s32.totalorder %s30, 0
      %p392 = por %p390, %p391
      %p393 = scmp.ne.s32.totalorder %s381, %s382
      %p394 = scmp.eq.s32.totalorder %s31, 3
      %p395 = por %p393, %p394
      %p397 = scmp.ne.s32.totalorder %s382, %s396
      %p398 = scmp.eq.s32.totalorder %s31, 0
      %p399 = por %p397, %p398
      %s400 = ssub.s32 %s32, %s44
      %p401 = scmp.eq.s32.totalorder %s400, 0
      %s403 = sadd.s32 %s402, 1
      %s404 = scalar_select %p401, %s402, %s403
      %p407 = pneg %p401
      %p408 = scmp.eq.s32.totalorder %s25, 3
      %p409 = por %p407, %p408
      %p410 = scmp.ne.s32.totalorder %s402, %s405
      %p411 = scmp.eq.s32.totalorder %s25, 0
      %p412 = por %p410, %p411
      %p413 = scmp.ne.s32.totalorder %s402, %s405
      %p414 = scmp.eq.s32.totalorder %s30, 3
      %p415 = por %p413, %p414
      %p416 = scmp.ne.s32.totalorder %s405, %s406
      %p417 = scmp.eq.s32.totalorder %s30, 0
      %p418 = por %p416, %p417
      %p419 = scmp.ne.s32.totalorder %s405, %s406
      %p420 = scmp.eq.s32.totalorder %s31, 3
      %p421 = por %p419, %p420
      %p423 = scmp.ne.s32.totalorder %s406, %s422
      %p424 = scmp.eq.s32.totalorder %s31, 0
      %p425 = por %p423, %p424
      %p426 = scmp.le.s32.totalorder 1, %s25
      %p427 = scmp.lt.s32.totalorder %s25, 5
      %p428 = pnand %p426, %p427
      %p429 = pneg %p428
      // Predicated region
      $region9: #{owl3_logits_forward.1} parent=5 // pred_check
        _
      $region10: #{owl3_logits_forward.1} parent=5 // pred_check_branch
        %431 = sbr.rel (%p428) target = $region12
      $region11: #{owl3_logits_forward.1} parent=5 // pred_region
        %s432 = ssub.s32 %s25, 1
        // Predicated region
        $region13: #{owl3_logits_forward.1} parent=11 // pred_check
          %p433 = pneg %p110
        $region14: #{owl3_logits_forward.1} parent=11 // pred_check_branch
          %435 = sbr.rel (%p433) target = $region16
        $region15: #{owl3_logits_forward.1} parent=11 // pred_region
          _
        $region16: #{owl3_logits_forward.1} parent=11 // pred_fallthru
          _
        // Predicated region
        $region17: #{owl3_logits_forward.1} parent=11 // pred_check
          %p436 = pneg %p131
        $region18: #{owl3_logits_forward.1} parent=11 // pred_check_branch
          %438 = sbr.rel (%p436) target = $region20
        $region19: #{owl3_logits_forward.1} parent=11 // pred_region
          %440 = vsyncadd [#allocation5], 0
          %s441 = sshll.u32 %s3, 4
          %s442 = int_to_ptr.hbm [resolvable:$true] %s441
          %s443 = sshll.u32 [#allocation4], 4
          %s444 = int_to_ptr.vmem [resolvable:$true] %s443
          %449 = dma.hbm_to_vmem [thread:$0]  %s442, 4096, %s444, [#allocation5], 128, 128, 8
        $region20: #{owl3_logits_forward.1} parent=11 // pred_fallthru
          _
        // Predicated region
        $region21: #{owl3_logits_forward.1} parent=11 // pred_check
          %p450 = pneg %p152
        $region22: #{owl3_logits_forward.1} parent=11 // pred_check_branch
          %452 = sbr.rel (%p450) target = $region24
        $region23: #{owl3_logits_forward.1} parent=11 // pred_region
          _
        $region24: #{owl3_logits_forward.1} parent=11 // pred_fallthru
          _
        // Predicated region
        $region25: #{owl3_logits_forward.1} parent=11 // pred_check
          %p453 = pneg %p173
        $region26: #{owl3_logits_forward.1} parent=11 // pred_check_branch
          %455 = sbr.rel (%p453) target = $region28
        $region27: #{owl3_logits_forward.1} parent=11 // pred_region
          _
        $region28: #{owl3_logits_forward.1} parent=11 // pred_fallthru
          _
        // Predicated region
        $region29: #{owl3_logits_forward.1} parent=11 // pred_check
          %p456 = pneg %p194
        $region30: #{owl3_logits_forward.1} parent=11 // pred_check_branch
          %458 = sbr.rel (%p456) target = $region32
        $region31: #{owl3_logits_forward.1} parent=11 // pred_region
          _
        $region32: #{owl3_logits_forward.1} parent=11 // pred_fallthru
          _
        // Predicated region
        $region33: #{owl3_logits_forward.1} parent=11 // pred_check
          %p459 = pneg %p371
        $region34: #{owl3_logits_forward.1} parent=11 // pred_check_branch
          %461 = sbr.rel (%p459) target = $region36
        $region35: #{owl3_logits_forward.1} parent=11 // pred_region
          _
        $region36: #{owl3_logits_forward.1} parent=11 // pred_fallthru
          _
        // Predicated region
        $region37: #{owl3_logits_forward.1} parent=11 // pred_check
          %p462 = pneg %p392
        $region38: #{owl3_logits_forward.1} parent=11 // pred_check_branch
          %464 = sbr.rel (%p462) target = $region40
        $region39: #{owl3_logits_forward.1} parent=11 // pred_region
          _
        $region40: #{owl3_logits_forward.1} parent=11 // pred_fallthru
          _
      $region12: #{owl3_logits_forward.1} parent=5 // pred_fallthru
        _
      %p465 = scmp.lt.s32.totalorder %s25, 4
      // Predicated region
      $region41: #{owl3_logits_forward.1} parent=5 // pred_check
        %p466 = pneg %p465
      $region42: #{owl3_logits_forward.1} parent=5 // pred_check_branch
        %468 = sbr.rel (%p466) target = $region44
      $region43: #{owl3_logits_forward.1} parent=5 // pred_region
        // Predicated region
        $region45: #{owl3_logits_forward.1} parent=43 // pred_check
          %p469 = pneg %p57
        $region46: #{owl3_logits_forward.1} parent=43 // pred_check_branch
          %471 = sbr.rel (%p469) target = $region48
        $region47: #{owl3_logits_forward.1} parent=43 // pred_region
          %p472 = scmp.lt.s32.totalorder %s32, 1
          %s473 = scalar_select %p472, %s32, 1
          %s474 = smul.addr %s473, 4
          %s475 = smul.addr %s474, 4
          %s476 = scalar_lea.vmem %s0, %s475
        $region48: #{owl3_logits_forward.1} parent=43 // pred_fallthru
          _
        // Predicated region
        $region49: #{owl3_logits_forward.1} parent=43 // pred_check
          %p477 = pneg %p83
        $region50: #{owl3_logits_forward.1} parent=43 // pred_check_branch
          %479 = sbr.rel (%p477) target = $region52
        $region51: #{owl3_logits_forward.1} parent=43 // pred_region
          %p480 = scmp.lt.s32.totalorder %s32, 1
          %s481 = scalar_select %p480, %s32, 1
          %s482 = smul.addr %s481, 2
          %s483 = smul.addr %s482, 8
          %s484 = scalar_lea.vmem %s1, %s483
        $region52: #{owl3_logits_forward.1} parent=43 // pred_fallthru
          _
        // Predicated region
        $region53: #{owl3_logits_forward.1} parent=43 // pred_check
          %p485 = pneg %p214
        $region54: #{owl3_logits_forward.1} parent=43 // pred_check_branch
          %487 = sbr.rel (%p485) target = $region56
        $region55: #{owl3_logits_forward.1} parent=43 // pred_region
          %p488 = scmp.lt.s32.totalorder %s33, 1
          %s489 = scalar_select %p488, %s33, 1
          %s490 = scalar_lea.vmem %s7, %s489
        $region56: #{owl3_logits_forward.1} parent=43 // pred_fallthru
          _
        // Predicated region
        $region57: #{owl3_logits_forward.1} parent=43 // pred_check
          %p491 = pneg %p240
        $region58: #{owl3_logits_forward.1} parent=43 // pred_check_branch
          %493 = sbr.rel (%p491) target = $region60
        $region59: #{owl3_logits_forward.1} parent=43 // pred_region
          %p494 = scmp.lt.s32.totalorder %s33, 1
          %s495 = scalar_select %p494, %s33, 1
          %s496 = smul.addr %s495, 48
          %s497 = smul.addr %s496, 4
          %s498 = scalar_lea.vmem %s8, %s497
        $region60: #{owl3_logits_forward.1} parent=43 // pred_fallthru
          _
        // Predicated region
        $region61: #{owl3_logits_forward.1} parent=43 // pred_check
          %p499 = pneg %p266
        $region62: #{owl3_logits_forward.1} parent=43 // pred_check_branch
          %501 = sbr.rel (%p499) target = $region64
        $region63: #{owl3_logits_forward.1} parent=43 // pred_region
          %p502 = scmp.lt.s32.totalorder %s33, 1
          %s503 = scalar_select %p502, %s33, 1
          %s504 = smul.addr %s503, 16
          %s505 = smul.addr %s504, 4
          %s506 = scalar_lea.vmem %s9, %s505
        $region64: #{owl3_logits_forward.1} parent=43 // pred_fallthru
          _
        // Predicated region
        $region65: #{owl3_logits_forward.1} parent=43 // pred_check
          %p507 = pneg %p292
        $region66: #{owl3_logits_forward.1} parent=43 // pred_check_branch
          %509 = sbr.rel (%p507) target = $region68
        $region67: #{owl3_logits_forward.1} parent=43 // pred_region
          %p510 = scmp.lt.s32.totalorder %s33, 1
          %s511 = scalar_select %p510, %s33, 1
          %s512 = scalar_lea.vmem %s10, %s511
        $region68: #{owl3_logits_forward.1} parent=43 // pred_fallthru
          _
        // Predicated region
        $region69: #{owl3_logits_forward.1} parent=43 // pred_check
          %p513 = pneg %p318
        $region70: #{owl3_logits_forward.1} parent=43 // pred_check_branch
          %515 = sbr.rel (%p513) target = $region72
        $region71: #{owl3_logits_forward.1} parent=43 // pred_region
          %p516 = scmp.lt.s32.totalorder %s33, 1
          %s517 = scalar_select %p516, %s33, 1
          %s518 = smul.addr %s517, 64
          %s519 = smul.addr %s518, 4
          %s520 = scalar_lea.vmem %s11, %s519
        $region72: #{owl3_logits_forward.1} parent=43 // pred_fallthru
          _
        // Predicated region
        $region73: #{owl3_logits_forward.1} parent=43 // pred_check
          %p521 = pneg %p344
        $region74: #{owl3_logits_forward.1} parent=43 // pred_check_branch
          %523 = sbr.rel (%p521) target = $region76
        $region75: #{owl3_logits_forward.1} parent=43 // pred_region
          %s524 = sand.u32 %s334, 1
          %s525 = scalar_lea.sflag [#allocation7], %s524
          %s526 = sand.u32 %s334, 1
          %s527 = smul.addr %s526, 128
          %s528 = scalar_lea.vmem [#allocation6], %s527
          %530 = vsyncadd %s525, 0
          %s531 = smul.addr %s33, 32
          %s532 = smul.addr %s531, 4
          %s533 = scalar_lea.hbm %s12, %s532
          %s534 = sshll.u32 %s533, 4
          %s535 = int_to_ptr.hbm [resolvable:$true] %s534
          %s536 = sshll.u32 %s528, 4
          %s537 = int_to_ptr.vmem [resolvable:$true] %s536
          %542 = dma.hbm_to_vmem [thread:$0]  %s535, 2048, %s537, %s525, 64, 64, 4
        $region76: #{owl3_logits_forward.1} parent=43 // pred_fallthru
          _
      $region44: #{owl3_logits_forward.1} parent=5 // pred_fallthru
        _
      %p543 = scmp.le.s32.totalorder 1, %s25
      %p544 = scmp.lt.s32.totalorder %s25, 5
      %p545 = pnand %p543, %p544
      %p546 = pneg %p545
      // Predicated region
      $region77: #{owl3_logits_forward.1} parent=5 // pred_check
        _
      $region78: #{owl3_logits_forward.1} parent=5 // pred_check_branch
        %548 = sbr.rel (%p545) target = $region80
      $region79: #{owl3_logits_forward.1} parent=5 // pred_region
        %s549 = ssub.s32 %s25, 1
        // Predicated region
        $region81: #{owl3_logits_forward.1} parent=79 // pred_check
          %p550 = pneg %p131
        $region82: #{owl3_logits_forward.1} parent=79 // pred_check_branch
          %552 = sbr.rel (%p550) target = $region84
        $region83: #{owl3_logits_forward.1} parent=79 // pred_region
          %554 = dma.done [#allocation5], 4096
        $region84: #{owl3_logits_forward.1} parent=79 // pred_fallthru
          _
        %s555 = sand.u32 %s337, 1
        %s556 = scalar_lea.sflag [#allocation7], %s555
        %s557 = sand.u32 %s337, 1
        %s558 = smul.addr %s557, 128
        %s559 = scalar_lea.vmem [#allocation6], %s558
        // Predicated region
        $region85: #{owl3_logits_forward.1} parent=79 // pred_check
          %p560 = pneg %p350
        $region86: #{owl3_logits_forward.1} parent=79 // pred_check_branch
          %562 = sbr.rel (%p560) target = $region88
        $region87: #{owl3_logits_forward.1} parent=79 // pred_region
          %564 = dma.done %s556, 2048
        $region88: #{owl3_logits_forward.1} parent=79 // pred_fallthru
          _
        %p565 = scmp.lt.s32.totalorder %s34, 1
        %s566 = scalar_select %p565, %s34, 1
        %s567 = smul.addr %s566, 4
        %s568 = smul.addr %s567, 4
        %s569 = scalar_lea.vmem %s0, %s568
        %p570 = pneg %p63
        %p571 = pneg %p60
        %p572 = scmp.lt.s32.totalorder %s34, 1
        %s573 = scalar_select %p572, %s34, 1
        %s574 = smul.addr %s573, 2
        %s575 = smul.addr %s574, 8
        %s576 = scalar_lea.vmem %s1, %s575
        %p577 = pneg %p89
        %p578 = pneg %p86
        %p579 = pneg %p110
        %p580 = pneg %p107
        %p581 = pneg %p131
        %p582 = pneg %p128
        %p583 = pneg %p152
        %p584 = pneg %p149
        %p585 = pneg %p173
        %p586 = pneg %p170
        %p587 = pneg %p194
        %p588 = pneg %p191
        %p589 = scmp.lt.s32.totalorder %s35, 1
        %s590 = scalar_select %p589, %s35, 1
        %s591 = scalar_lea.vmem %s7, %s590
        %p592 = pneg %p220
        %p593 = pneg %p217
        %p594 = scmp.lt.s32.totalorder %s35, 1
        %s595 = scalar_select %p594, %s35, 1
        %s596 = smul.addr %s595, 48
        %s597 = smul.addr %s596, 4
        %s598 = scalar_lea.vmem %s8, %s597
        %p599 = pneg %p246
        %p600 = pneg %p243
        %p601 = scmp.lt.s32.totalorder %s35, 1
        %s602 = scalar_select %p601, %s35, 1
        %s603 = smul.addr %s602, 16
        %s604 = smul.addr %s603, 4
        %s605 = scalar_lea.vmem %s9, %s604
        %p606 = pneg %p272
        %p607 = pneg %p269
        %p608 = scmp.lt.s32.totalorder %s35, 1
        %s609 = scalar_select %p608, %s35, 1
        %s610 = scalar_lea.vmem %s10, %s609
        %p611 = pneg %p298
        %p612 = pneg %p295
        %p613 = scmp.lt.s32.totalorder %s35, 1
        %s614 = scalar_select %p613, %s35, 1
        %s615 = smul.addr %s614, 64
        %s616 = smul.addr %s615, 4
        %s617 = scalar_lea.vmem %s11, %s616
        %p618 = pneg %p324
        %p619 = pneg %p321
        %s620 = sand.u32 %s337, 1
        %s621 = scalar_lea.sflag [#allocation7], %s620
        %s622 = sand.u32 %s337, 1
        %s623 = smul.addr %s622, 128
        %s624 = scalar_lea.vmem [#allocation6], %s623
        %p625 = pneg %p350
        %p626 = pneg %p347
        %p627 = pneg %p371
        %p628 = pneg %p368
        %p629 = pneg %p392
        %p630 = pneg %p389
        %p631 = pneg %p418
        %p632 = pneg %p415
        %p633 = scmp.lt.s32.totalorder %s34, 1
        %s634 = scalar_select %p633, %s34, 1
        %s635 = smul.addr %s634, 2
        %s636 = scalar_lea.vmem %s15, %s635
        %p637 = scmp.lt.s32.totalorder %s34, 1
        %s638 = scalar_select %p637, %s34, 1
        %s639 = smul.addr %s638, 4
        %s640 = smul.addr %s639, 4
        %s641 = scalar_lea.vmem %s0, %s640
        %p642 = scmp.lt.s32.totalorder %s34, 1
        %s643 = scalar_select %p642, %s34, 1
        %s644 = smul.addr %s643, 2
        %s645 = smul.addr %s644, 8
        %s646 = scalar_lea.vmem %s1, %s645
        %p647 = scmp.lt.s32.totalorder %s35, 1
        %s648 = scalar_select %p647, %s35, 1
        %s649 = scalar_lea.vmem %s7, %s648
        %p650 = scmp.lt.s32.totalorder %s35, 1
        %s651 = scalar_select %p650, %s35, 1
        %s652 = smul.addr %s651, 48
        %s653 = smul.addr %s652, 4
        %s654 = scalar_lea.vmem %s8, %s653
        %p655 = scmp.lt.s32.totalorder %s35, 1
        %s656 = scalar_select %p655, %s35, 1
        %s657 = smul.addr %s656, 16
        %s658 = smul.addr %s657, 4
        %s659 = scalar_lea.vmem %s9, %s658
        %p660 = scmp.lt.s32.totalorder %s35, 1
        %s661 = scalar_select %p660, %s35, 1
        %s662 = scalar_lea.vmem %s10, %s661
        %p663 = scmp.lt.s32.totalorder %s35, 1
        %s664 = scalar_select %p663, %s35, 1
        %s665 = smul.addr %s664, 64
        %s666 = smul.addr %s665, 4
        %s667 = scalar_lea.vmem %s11, %s666
        %p668 = scmp.lt.s32.totalorder %s34, 1
        %s669 = scalar_select %p668, %s34, 1
        %s670 = smul.addr %s669, 2
        %s671 = scalar_lea.vmem %s15, %s670
        %p673 = scmp.eq.s32.totalorder %s35, 0
        // Predicated region
        $region89: #{owl3_logits_forward.1} parent=79 // pred_check
          %p674 = pneg %p673
        $region90: #{owl3_logits_forward.1} parent=79 // pred_check_branch
          %676 = sbr.rel (%p674) target = $region92
        $region91: #{owl3_logits_forward.1} parent=79 // pred_region
          %v677 = vld [vmem:[%s641] sm:$0xff]
          %v678 = vld [vmem:[%s641 + $0x8] sm:$0xff]
          %v679 = vld [vmem:[%s2] sm:$0xf]
          %v680 = vld [vmem:[%s2 + $0x4] sm:$0xf]
          %v681 = vld [vmem:[%s2 + $0x8] sm:$0xf]
          %v682 = vld [vmem:[%s2 + $0xc] sm:$0xf]
          %v683 = vld [vmem:[%s2 + $0x10] sm:$0xf]
          %v684 = vld [vmem:[%s2 + $0x14] sm:$0xf]
          %v685 = vld [vmem:[%s2 + $0x18] sm:$0xf]
          %v686 = vld [vmem:[%s2 + $0x1c] sm:$0xf]
          %v687 = vld [vmem:[%s2 + $0x20] sm:$0xf]
          %v688 = vld [vmem:[%s2 + $0x24] sm:$0xf]
          %v689 = vld [vmem:[%s2 + $0x28] sm:$0xf]
          %v690 = vld [vmem:[%s2 + $0x2c] sm:$0xf]
          %v691 = vld [vmem:[%s2 + $0x30] sm:$0xf]
          %v692 = vld [vmem:[%s2 + $0x34] sm:$0xf]
          %v693 = vld [vmem:[%s2 + $0x38] sm:$0xf]
          %v694 = vld [vmem:[%s2 + $0x3c] sm:$0xf]
          %v695 = vld [vmem:[%s2 + $0x40] sm:$0xf]
          %v696 = vld [vmem:[%s2 + $0x44] sm:$0xf]
          %v697 = vld [vmem:[%s2 + $0x48] sm:$0xf]
          %v698 = vld [vmem:[%s2 + $0x4c] sm:$0xf]
          %v699 = vld [vmem:[%s2 + $0x50] sm:$0xf]
          %v700 = vld [vmem:[%s2 + $0x54] sm:$0xf]
          %v701 = vld [vmem:[%s2 + $0x58] sm:$0xf]
          %v702 = vld [vmem:[%s2 + $0x5c] sm:$0xf]
          %v703 = vld [vmem:[%s646] sm:$0xff]
          %v704 = vld [vmem:[%s646 + $0x8] sm:$0xff]
          %v707 = vunpack.c.l.b16 %v677
          %v708 = vunpack.c.h.b16 %v677
          %v709 = vunpack.c.l.b16 %v678
          %v710 = vunpack.c.h.b16 %v678
          %v711 = vpack.c.b16 %v709, %v707
          %v712 = vpack.c.b16 %v710, %v708
          %v738 = vunpack.c.l.b16 %v679
          %v739 = vunpack.c.l.b16 %v680
          %v740 = vunpack.c.l.b16 %v681
          %v741 = vunpack.c.l.b16 %v682
          %v742 = vunpack.c.l.b16 %v683
          %v743 = vunpack.c.l.b16 %v684
          %v744 = vunpack.c.l.b16 %v685
          %v745 = vunpack.c.l.b16 %v686
          %v746 = vunpack.c.l.b16 %v687
          %v747 = vunpack.c.l.b16 %v688
          %v748 = vunpack.c.l.b16 %v689
          %v749 = vunpack.c.l.b16 %v690
          %v750 = vunpack.c.l.b16 %v691
          %v751 = vunpack.c.l.b16 %v692
          %v752 = vunpack.c.l.b16 %v693
          %v753 = vunpack.c.l.b16 %v694
          %v754 = vunpack.c.l.b16 %v695
          %v755 = vunpack.c.l.b16 %v696
          %v756 = vunpack.c.l.b16 %v697
          %v757 = vunpack.c.l.b16 %v698
          %v758 = vunpack.c.l.b16 %v699
          %v759 = vunpack.c.l.b16 %v700
          %v760 = vunpack.c.l.b16 %v701
          %v761 = vunpack.c.l.b16 %v702
          %v762 = vpack.c.b16 %v739, %v738
          %v763 = vpack.c.b16 %v741, %v740
          %v764 = vpack.c.b16 %v743, %v742
          %v765 = vpack.c.b16 %v745, %v744
          %v766 = vpack.c.b16 %v747, %v746
          %v767 = vpack.c.b16 %v749, %v748
          %v768 = vpack.c.b16 %v751, %v750
          %v769 = vpack.c.b16 %v753, %v752
          %v770 = vpack.c.b16 %v755, %v754
          %v771 = vpack.c.b16 %v757, %v756
          %v772 = vpack.c.b16 %v759, %v758
          %v773 = vpack.c.b16 %v761, %v760
          %vm786 = vcmask 523264
          %v788 = vsel %vm786, %v712, 0
          %790 = vmatpush.bf16.msra.mxu0 %v769
          %791 = vmatpush.bf16.msra.mxu0 %v768
          %792 = vmatpush.bf16.msra.mxu0 %v767
          %793 = vmatpush.bf16.msra.mxu0 %v766
          %794 = vmatpush.bf16.msra.mxu0 %v765
          %795 = vmatpush.bf16.msra.mxu0 %v764
          %796 = vmatpush.bf16.msra.mxu0 %v763
          %797 = vmatpush.bf16.msra.mxu0 %v762
          %798 = vmatmul.bf16.gmra.mxu0 %v711
          %v799 = vpop.f32.mrf.mxu0
          %v800 = vadd.f32 %v703, %v799
          %v801 = vpop.f32.mrf.mxu0
          %v802 = vadd.f32 %v704, %v801
          %803 = vdwg.mxu0
          %804 = vmatpush.bf16.msra.mxu0 0
          %805 = vmatpush.bf16.msra.mxu0 0
          %806 = vmatpush.bf16.msra.mxu0 0
          %807 = vmatpush.bf16.msra.mxu0 0
          %808 = vmatpush.bf16.msra.mxu0 %v773
          %809 = vmatpush.bf16.msra.mxu0 %v772
          %810 = vmatpush.bf16.msra.mxu0 %v771
          %811 = vmatpush.bf16.msra.mxu0 %v770
          %812 = vmatmul.bf16.gmra.mxu0 %v788
          %v813 = vpop.f32.mrf.mxu0
          %v814 = vadd.f32 %v800, %v813
          %v815 = vpop.f32.mrf.mxu0
          %v816 = vadd.f32 %v802, %v815
          %817 = vdwg.mxu0
          %818 = vst [vmem:[#allocation2] sm:$0xff] %v814
          %819 = vst [vmem:[#allocation2 + $0x8] sm:$0xff] %v816
        $region92: #{owl3_logits_forward.1} parent=79 // pred_fallthru
          _
        %v820 = vld [vmem:[#allocation2] sm:$0xff]
        %v821 = vld [vmem:[#allocation2 + $0x8] sm:$0xff]
        %v822 = vld [vmem:[%s6] sm:$0xff]
        %v823 = vld [vmem:[%s6 + $0x8] sm:$0xff]
        %v824 = vld [vmem:[%s649] sm:$0x1]
        %v825 = vunpack.c.l.bf16 %v824
        %v826 = vmul.f32 %v820, %v820
        %v827 = vmul.f32 %v821, %v821
        %828 = vadd.xlane.f32.xlu0 %v826
        %v829 = vpop.xlane.xlu0 %828
        %830 = vadd.xlane.f32.xlu0 %v827
        %v831 = vpop.xlane.xlu0 %830
        %v832 = vrcp.pop 128.0
        %v833 = vmul.f32 128.0, %v832
        %v834 = vsub.f32 1.0, %v833
        %v835 = vmul.f32 %v832, %v834
        %v836 = vadd.f32 %v832, %v835
        %vm837 = vweird.f32 %v832
        %v838 = vsel %vm837, %v832, %v836
        %v839 = vmul.f32 %v829, %v838
        %v840 = vmul.f32 %v831, %v838
        %v841 = vadd.f32 %v839, 1e-06
        %v842 = vadd.f32 %v840, 1e-06
        %v843 = vrsqrt.pop %v841
        %v844 = vmul.f32 %v843, %v841
        %v845 = vmul.f32 %v844, %v843
        %v846 = vmul.f32 0.5, %v845
        %v847 = vsub.f32 1.5, %v846
        %v848 = vmul.f32 %v843, %v847
        %vm849 = vweird.f32 %v841
        %vm850 = vweird.f32 %v843
        %vm851 = vmor %vm849, %vm850
        %v852 = vsel %vm851, %v843, %v848
        %v853 = vrsqrt.pop %v842
        %v854 = vmul.f32 %v853, %v842
        %v855 = vmul.f32 %v854, %v853
        %v856 = vmul.f32 0.5, %v855
        %v857 = vsub.f32 1.5, %v856
        %v858 = vmul.f32 %v853, %v857
        %vm859 = vweird.f32 %v842
        %vm860 = vweird.f32 %v853
        %vm861 = vmor %vm859, %vm860
        %v862 = vsel %vm861, %v853, %v858
        %v863 = vmul.f32 %v820, %v852
        %v864 = vmul.f32 %v821, %v862
        %v865 = vperm.slane %v825, 0
        %v866 = vmul.f32 %v863, %v865
        %v867 = vmul.f32 %v864, %v865
        %v868 = vpack.c.bf16 %v867, %v866
        %v869 = vld [vmem:[%s654] sm:$0xff]
        %v870 = vld [vmem:[%s654 + $0x8] sm:$0xf]
        %v871 = vld [vmem:[%s654 + $0xc] sm:$0xff]
        %v872 = vld [vmem:[%s654 + $0x14] sm:$0xf]
        %v873 = vld [vmem:[%s654 + $0x18] sm:$0xff]
        %v874 = vld [vmem:[%s654 + $0x20] sm:$0xf]
        %v875 = vld [vmem:[%s654 + $0x24] sm:$0xff]
        %v876 = vld [vmem:[%s654 + $0x2c] sm:$0xf]
        %v877 = vld [vmem:[%s654 + $0x30] sm:$0xff]
        %v878 = vld [vmem:[%s654 + $0x38] sm:$0xf]
        %v879 = vld [vmem:[%s654 + $0x3c] sm:$0xff]
        %v880 = vld [vmem:[%s654 + $0x44] sm:$0xf]
        %v881 = vld [vmem:[%s654 + $0x48] sm:$0xff]
        %v882 = vld [vmem:[%s654 + $0x50] sm:$0xf]
        %v883 = vld [vmem:[%s654 + $0x54] sm:$0xff]
        %v884 = vld [vmem:[%s654 + $0x5c] sm:$0xf]
        %v885 = vld [vmem:[%s654 + $0x60] sm:$0xff]
        %v886 = vld [vmem:[%s654 + $0x68] sm:$0xf]
        %v887 = vld [vmem:[%s654 + $0x6c] sm:$0xff]
        %v888 = vld [vmem:[%s654 + $0x74] sm:$0xf]
        %v889 = vld [vmem:[%s654 + $0x78] sm:$0xff]
        %v890 = vld [vmem:[%s654 + $0x80] sm:$0xf]
        %v891 = vld [vmem:[%s654 + $0x84] sm:$0xff]
        %v892 = vld [vmem:[%s654 + $0x8c] sm:$0xf]
        %v893 = vld [vmem:[%s654 + $0x90] sm:$0xff]
        %v894 = vld [vmem:[%s654 + $0x98] sm:$0xf]
        %v895 = vld [vmem:[%s654 + $0x9c] sm:$0xff]
        %v896 = vld [vmem:[%s654 + $0xa4] sm:$0xf]
        %v897 = vld [vmem:[%s654 + $0xa8] sm:$0xff]
        %v898 = vld [vmem:[%s654 + $0xb0] sm:$0xf]
        %v899 = vld [vmem:[%s654 + $0xb4] sm:$0xff]
        %v900 = vld [vmem:[%s654 + $0xbc] sm:$0xf]
        %v933 = vunpack.c.l.b16 %v869
        %v934 = vunpack.c.h.b16 %v869
        %v935 = vunpack.c.l.b16 %v870
        %v936 = vunpack.c.l.b16 %v871
        %v937 = vunpack.c.h.b16 %v871
        %v938 = vunpack.c.l.b16 %v872
        %v939 = vunpack.c.l.b16 %v873
        %v940 = vunpack.c.h.b16 %v873
        %v941 = vunpack.c.l.b16 %v874
        %v942 = vunpack.c.l.b16 %v875
        %v943 = vunpack.c.h.b16 %v875
        %v944 = vunpack.c.l.b16 %v876
        %v945 = vunpack.c.l.b16 %v877
        %v946 = vunpack.c.h.b16 %v877
        %v947 = vunpack.c.l.b16 %v878
        %v948 = vunpack.c.l.b16 %v879
        %v949 = vunpack.c.h.b16 %v879
        %v950 = vunpack.c.l.b16 %v880
        %v951 = vunpack.c.l.b16 %v881
        %v952 = vunpack.c.h.b16 %v881
        %v953 = vunpack.c.l.b16 %v882
        %v954 = vunpack.c.l.b16 %v883
        %v955 = vunpack.c.h.b16 %v883
        %v956 = vunpack.c.l.b16 %v884
        %v957 = vunpack.c.l.b16 %v885
        %v958 = vunpack.c.h.b16 %v885
        %v959 = vunpack.c.l.b16 %v886
        %v960 = vunpack.c.l.b16 %v887
        %v961 = vunpack.c.h.b16 %v887
        %v962 = vunpack.c.l.b16 %v888
        %v963 = vunpack.c.l.b16 %v889
        %v964 = vunpack.c.h.b16 %v889
        %v965 = vunpack.c.l.b16 %v890
        %v966 = vunpack.c.l.b16 %v891
        %v967 = vunpack.c.h.b16 %v891
        %v968 = vunpack.c.l.b16 %v892
        %v969 = vunpack.c.l.b16 %v893
        %v970 = vunpack.c.h.b16 %v893
        %v971 = vunpack.c.l.b16 %v894
        %v972 = vunpack.c.l.b16 %v895
        %v973 = vunpack.c.h.b16 %v895
        %v974 = vunpack.c.l.b16 %v896
        %v975 = vunpack.c.l.b16 %v897
        %v976 = vunpack.c.h.b16 %v897
        %v977 = vunpack.c.l.b16 %v898
        %v978 = vunpack.c.l.b16 %v899
        %v979 = vunpack.c.h.b16 %v899
        %v980 = vunpack.c.l.b16 %v900
        %v981 = vpack.c.b16 %v936, %v933
        %v982 = vpack.c.b16 %v937, %v934
        %v983 = vpack.c.b16 %v938, %v935
        %v984 = vpack.c.b16 %v942, %v939
        %v985 = vpack.c.b16 %v943, %v940
        %v986 = vpack.c.b16 %v944, %v941
        %v987 = vpack.c.b16 %v948, %v945
        %v988 = vpack.c.b16 %v949, %v946
        %v989 = vpack.c.b16 %v950, %v947
        %v990 = vpack.c.b16 %v954, %v951
        %v991 = vpack.c.b16 %v955, %v952
        %v992 = vpack.c.b16 %v956, %v953
        %v993 = vpack.c.b16 %v960, %v957
        %v994 = vpack.c.b16 %v961, %v958
        %v995 = vpack.c.b16 %v962, %v959
        %v996 = vpack.c.b16 %v966, %v963
        %v997 = vpack.c.b16 %v967, %v964
        %v998 = vpack.c.b16 %v968, %v965
        %v999 = vpack.c.b16 %v972, %v969
        %v1000 = vpack.c.b16 %v973, %v970
        %v1001 = vpack.c.b16 %v974, %v971
        %v1002 = vpack.c.b16 %v978, %v975
        %v1003 = vpack.c.b16 %v979, %v976
        %v1004 = vpack.c.b16 %v980, %v977
        %1029 = vmatpush.bf16.msra.mxu0 %v1002
        %1030 = vmatpush.bf16.msra.mxu0 %v999
        %1031 = vmatpush.bf16.msra.mxu0 %v996
        %1032 = vmatpush.bf16.msra.mxu0 %v993
        %1033 = vmatpush.bf16.msra.mxu0 %v990
        %1034 = vmatpush.bf16.msra.mxu0 %v987
        %1035 = vmatpush.bf16.msra.mxu0 %v984
        %1036 = vmatpush.bf16.msra.mxu0 %v981
        %1037 = vmatmul.bf16.gmra.mxu0 %v868
        %v1038 = vpop.f32.mrf.mxu0
        %v1039 = vadd.f32 0.0, %v1038
        %v1040 = vpop.f32.mrf.mxu0
        %v1041 = vadd.f32 0.0, %v1040
        %1042 = vdwg.mxu0
        %1043 = vmatpush.bf16.msra.mxu0 %v1003
        %1044 = vmatpush.bf16.msra.mxu0 %v1000
        %1045 = vmatpush.bf16.msra.mxu0 %v997
        %1046 = vmatpush.bf16.msra.mxu0 %v994
        %1047 = vmatpush.bf16.msra.mxu0 %v991
        %1048 = vmatpush.bf16.msra.mxu0 %v988
        %1049 = vmatpush.bf16.msra.mxu0 %v985
        %1050 = vmatpush.bf16.msra.mxu0 %v982
        %1051 = vmatmul.bf16.gmra.mxu0 %v868
        %v1052 = vpop.f32.mrf.mxu0
        %v1053 = vadd.f32 0.0, %v1052
        %v1054 = vpop.f32.mrf.mxu0
        %v1055 = vadd.f32 0.0, %v1054
        %1056 = vdwg.mxu0
        %1057 = vmatpush.bf16.msra.mxu0 %v1004
        %1058 = vmatpush.bf16.msra.mxu0 %v1001
        %1059 = vmatpush.bf16.msra.mxu0 %v998
        %1060 = vmatpush.bf16.msra.mxu0 %v995
        %1061 = vmatpush.bf16.msra.mxu0 %v992
        %1062 = vmatpush.bf16.msra.mxu0 %v989
        %1063 = vmatpush.bf16.msra.mxu0 %v986
        %1064 = vmatpush.bf16.msra.mxu0 %v983
        %1065 = vmatmul.bf16.gmra.mxu0 %v868
        %v1066 = vpop.f32.mrf.mxu0
        %v1067 = vadd.f32 0.0, %v1066
        %v1068 = vpop.f32.mrf.mxu0
        %v1069 = vadd.f32 0.0, %v1068
        %1070 = vdwg.mxu0
        %v1071 = vpack.c.bf16 %v1041, %v1039
        %v1072 = vpack.c.bf16 %v1055, %v1053
        %v1073 = vld [vmem:[#allocation4] sm:$0xff]
        %v1074 = vld [vmem:[#allocation4 + $0x8] sm:$0xff]
        %v1075 = vld [vmem:[#allocation4 + $0x10] sm:$0xff]
        %v1076 = vld [vmem:[#allocation4 + $0x18] sm:$0xff]
        %v1077 = vld [vmem:[#allocation4 + $0x20] sm:$0xff]
        %v1078 = vld [vmem:[#allocation4 + $0x28] sm:$0xff]
        %v1079 = vld [vmem:[#allocation4 + $0x30] sm:$0xff]
        %v1080 = vld [vmem:[#allocation4 + $0x38] sm:$0xff]
        %v1081 = vld [vmem:[#allocation4 + $0x40] sm:$0xff]
        %v1082 = vld [vmem:[#allocation4 + $0x48] sm:$0xff]
        %v1083 = vld [vmem:[#allocation4 + $0x50] sm:$0xff]
        %v1084 = vld [vmem:[#allocation4 + $0x58] sm:$0xff]
        %v1085 = vld [vmem:[#allocation4 + $0x60] sm:$0xff]
        %v1086 = vld [vmem:[#allocation4 + $0x68] sm:$0xff]
        %v1087 = vld [vmem:[#allocation4 + $0x70] sm:$0xff]
        %v1088 = vld [vmem:[#allocation4 + $0x78] sm:$0xff]
        %v1089 = vld [vmem:[#allocation4 + $0x80] sm:$0xff]
        %v1090 = vld [vmem:[#allocation4 + $0x88] sm:$0xff]
        %v1091 = vld [vmem:[#allocation4 + $0x90] sm:$0xff]
        %v1092 = vld [vmem:[#allocation4 + $0x98] sm:$0xff]
        %v1093 = vld [vmem:[#allocation4 + $0xa0] sm:$0xff]
        %v1094 = vld [vmem:[#allocation4 + $0xa8] sm:$0xff]
        %v1095 = vld [vmem:[#allocation4 + $0xb0] sm:$0xff]
        %v1096 = vld [vmem:[#allocation4 + $0xb8] sm:$0xff]
        %v1097 = vld [vmem:[#allocation4 + $0xc0] sm:$0xff]
        %v1098 = vld [vmem:[#allocation4 + $0xc8] sm:$0xff]
        %v1099 = vld [vmem:[#allocation4 + $0xd0] sm:$0xff]
        %v1100 = vld [vmem:[#allocation4 + $0xd8] sm:$0xff]
        %v1101 = vld [vmem:[#allocation4 + $0xe0] sm:$0xff]
        %v1102 = vld [vmem:[#allocation4 + $0xe8] sm:$0xff]
        %v1103 = vld [vmem:[#allocation4 + $0xf0] sm:$0xff]
        %v1104 = vld [vmem:[#allocation4 + $0xf8] sm:$0xff]
        %v1137 = vunpack.c.l.b16 %v1073
        %v1138 = vunpack.c.h.b16 %v1073
        %v1139 = vunpack.c.l.b16 %v1074
        %v1140 = vunpack.c.h.b16 %v1074
        %v1141 = vunpack.c.l.b16 %v1075
        %v1142 = vunpack.c.h.b16 %v1075
        %v1143 = vunpack.c.l.b16 %v1076
        %v1144 = vunpack.c.h.b16 %v1076
        %v1145 = vunpack.c.l.b16 %v1077
        %v1146 = vunpack.c.h.b16 %v1077
        %v1147 = vunpack.c.l.b16 %v1078
        %v1148 = vunpack.c.h.b16 %v1078
        %v1149 = vunpack.c.l.b16 %v1079
        %v1150 = vunpack.c.h.b16 %v1079
        %v1151 = vunpack.c.l.b16 %v1080
        %v1152 = vunpack.c.h.b16 %v1080
        %v1153 = vunpack.c.l.b16 %v1081
        %v1154 = vunpack.c.h.b16 %v1081
        %v1155 = vunpack.c.l.b16 %v1082
        %v1156 = vunpack.c.h.b16 %v1082
        %v1157 = vunpack.c.l.b16 %v1083
        %v1158 = vunpack.c.h.b16 %v1083
        %v1159 = vunpack.c.l.b16 %v1084
        %v1160 = vunpack.c.h.b16 %v1084
        %v1161 = vunpack.c.l.b16 %v1085
        %v1162 = vunpack.c.h.b16 %v1085
        %v1163 = vunpack.c.l.b16 %v1086
        %v1164 = vunpack.c.h.b16 %v1086
        %v1165 = vunpack.c.l.b16 %v1087
        %v1166 = vunpack.c.h.b16 %v1087
        %v1167 = vunpack.c.l.b16 %v1088
        %v1168 = vunpack.c.h.b16 %v1088
        %v1169 = vunpack.c.l.b16 %v1089
        %v1170 = vunpack.c.h.b16 %v1089
        %v1171 = vunpack.c.l.b16 %v1090
        %v1172 = vunpack.c.h.b16 %v1090
        %v1173 = vunpack.c.l.b16 %v1091
        %v1174 = vunpack.c.h.b16 %v1091
        %v1175 = vunpack.c.l.b16 %v1092
        %v1176 = vunpack.c.h.b16 %v1092
        %v1177 = vunpack.c.l.b16 %v1093
        %v1178 = vunpack.c.h.b16 %v1093
        %v1179 = vunpack.c.l.b16 %v1094
        %v1180 = vunpack.c.h.b16 %v1094
        %v1181 = vunpack.c.l.b16 %v1095
        %v1182 = vunpack.c.h.b16 %v1095
        %v1183 = vunpack.c.l.b16 %v1096
        %v1184 = vunpack.c.h.b16 %v1096
        %v1185 = vunpack.c.l.b16 %v1097
        %v1186 = vunpack.c.h.b16 %v1097
        %v1187 = vunpack.c.l.b16 %v1098
        %v1188 = vunpack.c.h.b16 %v1098
        %v1189 = vunpack.c.l.b16 %v1099
        %v1190 = vunpack.c.h.b16 %v1099
        %v1191 = vunpack.c.l.b16 %v1100
        %v1192 = vunpack.c.h.b16 %v1100
        %v1193 = vunpack.c.l.b16 %v1101
        %v1194 = vunpack.c.h.b16 %v1101
        %v1195 = vunpack.c.l.b16 %v1102
        %v1196 = vunpack.c.h.b16 %v1102
        %v1197 = vunpack.c.l.b16 %v1103
        %v1198 = vunpack.c.h.b16 %v1103
        %v1199 = vunpack.c.l.b16 %v1104
        %v1200 = vunpack.c.h.b16 %v1104
        %v1201 = vpack.c.b16 %v1139, %v1137
        %v1202 = vpack.c.b16 %v1140, %v1138
        %v1203 = vpack.c.b16 %v1143, %v1141
        %v1204 = vpack.c.b16 %v1144, %v1142
        %v1205 = vpack.c.b16 %v1147, %v1145
        %v1206 = vpack.c.b16 %v1148, %v1146
        %v1207 = vpack.c.b16 %v1151, %v1149
        %v1208 = vpack.c.b16 %v1152, %v1150
        %v1209 = vpack.c.b16 %v1155, %v1153
        %v1210 = vpack.c.b16 %v1156, %v1154
        %v1211 = vpack.c.b16 %v1159, %v1157
        %v1212 = vpack.c.b16 %v1160, %v1158
        %v1213 = vpack.c.b16 %v1163, %v1161
        %v1214 = vpack.c.b16 %v1164, %v1162
        %v1215 = vpack.c.b16 %v1167, %v1165
        %v1216 = vpack.c.b16 %v1168, %v1166
        %v1217 = vpack.c.b16 %v1171, %v1169
        %v1218 = vpack.c.b16 %v1172, %v1170
        %v1219 = vpack.c.b16 %v1175, %v1173
        %v1220 = vpack.c.b16 %v1176, %v1174
        %v1221 = vpack.c.b16 %v1179, %v1177
        %v1222 = vpack.c.b16 %v1180, %v1178
        %v1223 = vpack.c.b16 %v1183, %v1181
        %v1224 = vpack.c.b16 %v1184, %v1182
        %v1225 = vpack.c.b16 %v1187, %v1185
        %v1226 = vpack.c.b16 %v1188, %v1186
        %v1227 = vpack.c.b16 %v1191, %v1189
        %v1228 = vpack.c.b16 %v1192, %v1190
        %v1229 = vpack.c.b16 %v1195, %v1193
        %v1230 = vpack.c.b16 %v1196, %v1194
        %v1231 = vpack.c.b16 %v1199, %v1197
        %v1232 = vpack.c.b16 %v1200, %v1198
        %1265 = vmatpush.bf16.msra.mxu0 %v1215
        %1266 = vmatpush.bf16.msra.mxu0 %v1213
        %1267 = vmatpush.bf16.msra.mxu0 %v1211
        %1268 = vmatpush.bf16.msra.mxu0 %v1209
        %1269 = vmatpush.bf16.msra.mxu0 %v1207
        %1270 = vmatpush.bf16.msra.mxu0 %v1205
        %1271 = vmatpush.bf16.msra.mxu0 %v1203
        %1272 = vmatpush.bf16.msra.mxu0 %v1201
        %1273 = vmatmul.bf16.gmra.mxu0 %v1071
        %v1274 = vpop.f32.mrf.mxu0
        %v1275 = vadd.f32 0.0, %v1274
        %v1276 = vpop.f32.mrf.mxu0
        %v1277 = vadd.f32 0.0, %v1276
        %1278 = vdwg.mxu0
        %1279 = vmatpush.bf16.msra.mxu0 %v1231
        %1280 = vmatpush.bf16.msra.mxu0 %v1229
        %1281 = vmatpush.bf16.msra.mxu0 %v1227
        %1282 = vmatpush.bf16.msra.mxu0 %v1225
        %1283 = vmatpush.bf16.msra.mxu0 %v1223
        %1284 = vmatpush.bf16.msra.mxu0 %v1221
        %1285 = vmatpush.bf16.msra.mxu0 %v1219
        %1286 = vmatpush.bf16.msra.mxu0 %v1217
        %1287 = vmatmul.bf16.gmra.mxu0 %v1072
        %v1288 = vpop.f32.mrf.mxu0
        %v1289 = vadd.f32 %v1275, %v1288
        %v1290 = vpop.f32.mrf.mxu0
        %v1291 = vadd.f32 %v1277, %v1290
        %1292 = vdwg.mxu0
        %1293 = vmatpush.bf16.msra.mxu0 %v1216
        %1294 = vmatpush.bf16.msra.mxu0 %v1214
        %1295 = vmatpush.bf16.msra.mxu0 %v1212
        %1296 = vmatpush.bf16.msra.mxu0 %v1210
        %1297 = vmatpush.bf16.msra.mxu0 %v1208
        %1298 = vmatpush.bf16.msra.mxu0 %v1206
        %1299 = vmatpush.bf16.msra.mxu0 %v1204
        %1300 = vmatpush.bf16.msra.mxu0 %v1202
        %1301 = vmatmul.bf16.gmra.mxu0 %v1071
        %v1302 = vpop.f32.mrf.mxu0
        %v1303 = vadd.f32 0.0, %v1302
        %v1304 = vpop.f32.mrf.mxu0
        %v1305 = vadd.f32 0.0, %v1304
        %1306 = vdwg.mxu0
        %1307 = vmatpush.bf16.msra.mxu0 %v1232
        %1308 = vmatpush.bf16.msra.mxu0 %v1230
        %1309 = vmatpush.bf16.msra.mxu0 %v1228
        %1310 = vmatpush.bf16.msra.mxu0 %v1226
        %1311 = vmatpush.bf16.msra.mxu0 %v1224
        %1312 = vmatpush.bf16.msra.mxu0 %v1222
        %1313 = vmatpush.bf16.msra.mxu0 %v1220
        %1314 = vmatpush.bf16.msra.mxu0 %v1218
        %1315 = vmatmul.bf16.gmra.mxu0 %v1072
        %v1316 = vpop.f32.mrf.mxu0
        %v1317 = vadd.f32 %v1303, %v1316
        %v1318 = vpop.f32.mrf.mxu0
        %v1319 = vadd.f32 %v1305, %v1318
        %1320 = vdwg.mxu0
        %v1321 = vld [vmem:[%s4] sm:$0xff]
        %v1322 = vld [vmem:[%s4 + $0x8] sm:$0xff]
        %v1323 = vld [vmem:[%s4 + $0x10] sm:$0xff]
        %v1324 = vld [vmem:[%s4 + $0x18] sm:$0xff]
        %v1325 = vmul.f32 %v1039, %v1321
        %v1326 = vmul.f32 %v1053, %v1322
        %v1327 = vmul.f32 %v1041, %v1323
        %v1328 = vmul.f32 %v1055, %v1324
        %v1329 = vld [vmem:[%s5] sm:$0xff]
        %v1330 = vld [vmem:[%s5 + $0x8] sm:$0xff]
        %v1331 = vld [vmem:[%s5 + $0x10] sm:$0xff]
        %v1332 = vld [vmem:[%s5 + $0x18] sm:$0xff]
        %v1333 = vmul.f32 %v1289, %v1329
        %v1334 = vmul.f32 %v1317, %v1330
        %v1335 = vmul.f32 %v1291, %v1331
        %v1336 = vmul.f32 %v1319, %v1332
        %v1337 = vadd.f32 %v1325, %v1333
        %v1338 = vadd.f32 %v1326, %v1334
        %v1339 = vadd.f32 %v1327, %v1335
        %v1340 = vadd.f32 %v1328, %v1336
        %v1341 = vpack.c.bf16 %v1339, %v1337
        %v1342 = vpack.c.bf16 %v1340, %v1338
        %v1343 = vpack.c.bf16 %v1069, %v1067
        %vm1344 = vcmask 261120
        %v1346 = vsel %vm1344, %v1341, 0
        %v1349 = vsel %vm1344, %v1342, 0
        %1351 = vmatpush.bf16.xpose.msra.mxu0 0
        %1352 = vmatpush.bf16.xpose.msra.mxu0 0
        %1353 = vmatpush.bf16.xpose.msra.mxu0 0
        %1354 = vmatpush.bf16.xpose.msra.mxu0 0
        %1355 = vmatpush.bf16.xpose.msra.mxu0 0
        %1356 = vmatpush.bf16.xpose.msra.mxu0 0
        %1357 = vmatpush.bf16.xpose.msra.mxu0 0
        %1358 = vmatpush.bf16.xpose.msra.mxu0 %v1349
        %1359 = vmatmul.bf16.gmra.mxu0 %v1346
        %v1360 = vpop.f32.mrf.mxu0
        %v1361 = vadd.f32 %v822, %v1360
        %v1362 = vpop.f32.mrf.mxu0
        %v1363 = vadd.f32 %v823, %v1362
        %1364 = vdwg.mxu0
        %vm1365 = vcmask 130048
        %v1366 = vsel %vm1365, %v1361, -inf
        %1367 = vmax.xlane.f32.xlu0 %v1366
        %v1368 = vpop.xlane.xlu0 %1367
        %v1369 = vsel %vm1365, %v1363, -inf
        %1370 = vmax.xlane.f32.xlu0 %v1369
        %v1371 = vpop.xlane.xlu0 %1370
        %v1372 = vsub.f32 %v1361, %v1368
        %v1373 = vsub.f32 %v1363, %v1371
        %v1374 = vmul.f32 %v1372, 1.442695
        %v1375 = vpow.pop %v1374
        %v1376 = vmul.f32 %v1373, 1.442695
        %v1377 = vpow.pop %v1376
        %v1378 = vsel %vm1365, %v1375, 0.0
        %1379 = vadd.xlane.f32.xlu0 %v1378
        %v1380 = vpop.xlane.xlu0 %1379
        %v1381 = vsel %vm1365, %v1377, 0.0
        %1382 = vadd.xlane.f32.xlu0 %v1381
        %v1383 = vpop.xlane.xlu0 %1382
        %v1384 = vrcp.pop %v1380
        %v1385 = vrcp.pop %v1383
        %v1386 = vmul.f32 %v1375, %v1384
        %v1387 = vmul.f32 %v1377, %v1385
        %v1388 = vpack.c.bf16 %v1387, %v1386
        %v1390 = vsel %vm1365, %v1388, 0
        %1392 = vmatpush.bf16.msra.mxu0 0
        %1393 = vmatpush.bf16.msra.mxu0 0
        %1394 = vmatpush.bf16.msra.mxu0 0
        %1395 = vmatpush.bf16.msra.mxu0 0
        %1396 = vmatpush.bf16.msra.mxu0 0
        %1397 = vmatpush.bf16.msra.mxu0 0
        %1398 = vmatpush.bf16.msra.mxu0 0
        %1399 = vmatpush.bf16.msra.mxu0 %v1343
        %1400 = vmatmul.bf16.gmra.mxu0 %v1390
        %v1401 = vpop.f32.mrf.mxu0
        %v1402 = vadd.f32 0.0, %v1401
        %v1403 = vpop.f32.mrf.mxu0
        %v1404 = vadd.f32 0.0, %v1403
        %1405 = vdwg.mxu0
        %v1406 = vpack.c.bf16 %v1402, %v1402
        %v1407 = vpack.c.bf16 %v1404, %v1404
        %vm1408 = vcmask 257024
        %1409 = vst.msk [vmem:[#allocation3] sm:$0xf] %vm1408, %v1406
        %1410 = vst.msk [vmem:[#allocation3 + $0x4] sm:$0xf] %vm1408, %v1407
        %1412 = vrot.lane.b32.xlu0 %v1341, 96
        %v1413 = vpop.permute.xlu0 %1412
        %1415 = vrot.lane.b32.xlu0 %v1342, 96
        %v1416 = vpop.permute.xlu0 %1415
        %v1418 = vsel %vm1344, %v1413, 0
        %v1421 = vsel %vm1344, %v1416, 0
        %1423 = vmatpush.bf16.xpose.msra.mxu0 0
        %1424 = vmatpush.bf16.xpose.msra.mxu0 0
        %1425 = vmatpush.bf16.xpose.msra.mxu0 0
        %1426 = vmatpush.bf16.xpose.msra.mxu0 0
        %1427 = vmatpush.bf16.xpose.msra.mxu0 0
        %1428 = vmatpush.bf16.xpose.msra.mxu0 0
        %1429 = vmatpush.bf16.xpose.msra.mxu0 0
        %1430 = vmatpush.bf16.xpose.msra.mxu0 %v1421
        %1431 = vmatmul.bf16.gmra.mxu0 %v1418
        %v1432 = vpop.f32.mrf.mxu0
        %v1433 = vadd.f32 %v822, %v1432
        %v1434 = vpop.f32.mrf.mxu0
        %v1435 = vadd.f32 %v823, %v1434
        %1436 = vdwg.mxu0
        %v1437 = vsel %vm1365, %v1433, -inf
        %1438 = vmax.xlane.f32.xlu0 %v1437
        %v1439 = vpop.xlane.xlu0 %1438
        %v1440 = vsel %vm1365, %v1435, -inf
        %1441 = vmax.xlane.f32.xlu0 %v1440
        %v1442 = vpop.xlane.xlu0 %1441
        %v1443 = vsub.f32 %v1433, %v1439
        %v1444 = vsub.f32 %v1435, %v1442
        %v1445 = vmul.f32 %v1443, 1.442695
        %v1446 = vpow.pop %v1445
        %v1447 = vmul.f32 %v1444, 1.442695
        %v1448 = vpow.pop %v1447
        %v1449 = vsel %vm1365, %v1446, 0.0
        %1450 = vadd.xlane.f32.xlu0 %v1449
        %v1451 = vpop.xlane.xlu0 %1450
        %v1452 = vsel %vm1365, %v1448, 0.0
        %1453 = vadd.xlane.f32.xlu0 %v1452
        %v1454 = vpop.xlane.xlu0 %1453
        %v1455 = vrcp.pop %v1451
        %v1456 = vrcp.pop %v1454
        %v1457 = vmul.f32 %v1446, %v1455
        %v1458 = vmul.f32 %v1448, %v1456
        %v1459 = vpack.c.bf16 %v1458, %v1457
        %1461 = vrot.lane.b32.xlu0 %v1343, 96
        %v1462 = vpop.permute.xlu0 %1461
        %v1465 = vsel %vm1365, %v1459, 0
        %1467 = vmatpush.bf16.msra.mxu0 0
        %1468 = vmatpush.bf16.msra.mxu0 0
        %1469 = vmatpush.bf16.msra.mxu0 0
        %1470 = vmatpush.bf16.msra.mxu0 0
        %1471 = vmatpush.bf16.msra.mxu0 0
        %1472 = vmatpush.bf16.msra.mxu0 0
        %1473 = vmatpush.bf16.msra.mxu0 0
        %1474 = vmatpush.bf16.msra.mxu0 %v1462
        %1475 = vmatmul.bf16.gmra.mxu0 %v1465
        %v1476 = vpop.f32.mrf.mxu0
        %v1477 = vadd.f32 0.0, %v1476
        %v1478 = vpop.f32.mrf.mxu0
        %v1479 = vadd.f32 0.0, %v1478
        %1480 = vdwg.mxu0
        %v1481 = vpack.c.bf16 %v1477, %v1477
        %v1482 = vpack.c.bf16 %v1479, %v1479
        %1485 = vrot.lane.b32.xlu0 %v1481, 32
        %v1486 = vpop.permute.xlu0 %1485
        %1487 = vrot.lane.b32.xlu0 %v1482, 32
        %v1488 = vpop.permute.xlu0 %1487
        %vm1491 = vcmask 519424
        %1492 = vst.msk [vmem:[#allocation3] sm:$0xf] %vm1491, %v1486
        %1493 = vst.msk [vmem:[#allocation3 + $0x4] sm:$0xf] %vm1491, %v1488
        %1494 = vrot.lane.b32.xlu0 %v1341, 64
        %v1495 = vpop.permute.xlu0 %1494
        %1496 = vrot.lane.b32.xlu0 %v1342, 64
        %v1497 = vpop.permute.xlu0 %1496
        %v1499 = vsel %vm1344, %v1495, 0
        %v1502 = vsel %vm1344, %v1497, 0
        %1504 = vmatpush.bf16.xpose.msra.mxu0 0
        %1505 = vmatpush.bf16.xpose.msra.mxu0 0
        %1506 = vmatpush.bf16.xpose.msra.mxu0 0
        %1507 = vmatpush.bf16.xpose.msra.mxu0 0
        %1508 = vmatpush.bf16.xpose.msra.mxu0 0
        %1509 = vmatpush.bf16.xpose.msra.mxu0 0
        %1510 = vmatpush.bf16.xpose.msra.mxu0 0
        %1511 = vmatpush.bf16.xpose.msra.mxu0 %v1502
        %1512 = vmatmul.bf16.gmra.mxu0 %v1499
        %v1513 = vpop.f32.mrf.mxu0
        %v1514 = vadd.f32 %v822, %v1513
        %v1515 = vpop.f32.mrf.mxu0
        %v1516 = vadd.f32 %v823, %v1515
        %1517 = vdwg.mxu0
        %v1518 = vsel %vm1365, %v1514, -inf
        %1519 = vmax.xlane.f32.xlu0 %v1518
        %v1520 = vpop.xlane.xlu0 %1519
        %v1521 = vsel %vm1365, %v1516, -inf
        %1522 = vmax.xlane.f32.xlu0 %v1521
        %v1523 = vpop.xlane.xlu0 %1522
        %v1524 = vsub.f32 %v1514, %v1520
        %v1525 = vsub.f32 %v1516, %v1523
        %v1526 = vmul.f32 %v1524, 1.442695
        %v1527 = vpow.pop %v1526
        %v1528 = vmul.f32 %v1525, 1.442695
        %v1529 = vpow.pop %v1528
        %v1530 = vsel %vm1365, %v1527, 0.0
        %1531 = vadd.xlane.f32.xlu0 %v1530
        %v1532 = vpop.xlane.xlu0 %1531
        %v1533 = vsel %vm1365, %v1529, 0.0
        %1534 = vadd.xlane.f32.xlu0 %v1533
        %v1535 = vpop.xlane.xlu0 %1534
        %v1536 = vrcp.pop %v1532
        %v1537 = vrcp.pop %v1535
        %v1538 = vmul.f32 %v1527, %v1536
        %v1539 = vmul.f32 %v1529, %v1537
        %v1540 = vpack.c.bf16 %v1539, %v1538
        %1541 = vrot.lane.b32.xlu0 %v1343, 64
        %v1542 = vpop.permute.xlu0 %1541
        %v1545 = vsel %vm1365, %v1540, 0
        %1547 = vmatpush.bf16.msra.mxu0 0
        %1548 = vmatpush.bf16.msra.mxu0 0
        %1549 = vmatpush.bf16.msra.mxu0 0
        %1550 = vmatpush.bf16.msra.mxu0 0
        %1551 = vmatpush.bf16.msra.mxu0 0
        %1552 = vmatpush.bf16.msra.mxu0 0
        %1553 = vmatpush.bf16.msra.mxu0 0
        %1554 = vmatpush.bf16.msra.mxu0 %v1542
        %1555 = vmatmul.bf16.gmra.mxu0 %v1545
        %v1556 = vpop.f32.mrf.mxu0
        %v1557 = vadd.f32 0.0, %v1556
        %v1558 = vpop.f32.mrf.mxu0
        %v1559 = vadd.f32 0.0, %v1558
        %1560 = vdwg.mxu0
        %v1561 = vpack.c.bf16 %v1557, %v1557
        %v1562 = vpack.c.bf16 %v1559, %v1559
        %1565 = vrot.lane.b32.xlu0 %v1561, 64
        %v1566 = vpop.permute.xlu0 %1565
        %1567 = vrot.lane.b32.xlu0 %v1562, 64
        %v1568 = vpop.permute.xlu0 %1567
        %vm1571 = vcmask 781824
        %1572 = vst.msk [vmem:[#allocation3] sm:$0xf] %vm1571, %v1566
        %1573 = vst.msk [vmem:[#allocation3 + $0x4] sm:$0xf] %vm1571, %v1568
        %1574 = vrot.lane.b32.xlu0 %v1341, 32
        %v1575 = vpop.permute.xlu0 %1574
        %1576 = vrot.lane.b32.xlu0 %v1342, 32
        %v1577 = vpop.permute.xlu0 %1576
        %v1579 = vsel %vm1344, %v1575, 0
        %v1582 = vsel %vm1344, %v1577, 0
        %1584 = vmatpush.bf16.xpose.msra.mxu0 0
        %1585 = vmatpush.bf16.xpose.msra.mxu0 0
        %1586 = vmatpush.bf16.xpose.msra.mxu0 0
        %1587 = vmatpush.bf16.xpose.msra.mxu0 0
        %1588 = vmatpush.bf16.xpose.msra.mxu0 0
        %1589 = vmatpush.bf16.xpose.msra.mxu0 0
        %1590 = vmatpush.bf16.xpose.msra.mxu0 0
        %1591 = vmatpush.bf16.xpose.msra.mxu0 %v1582
        %1592 = vmatmul.bf16.gmra.mxu0 %v1579
        %v1593 = vpop.f32.mrf.mxu0
        %v1594 = vadd.f32 %v822, %v1593
        %v1595 = vpop.f32.mrf.mxu0
        %v1596 = vadd.f32 %v823, %v1595
        %1597 = vdwg.mxu0
        %v1598 = vsel %vm1365, %v1594, -inf
        %1599 = vmax.xlane.f32.xlu0 %v1598
        %v1600 = vpop.xlane.xlu0 %1599
        %v1601 = vsel %vm1365, %v1596, -inf
        %1602 = vmax.xlane.f32.xlu0 %v1601
        %v1603 = vpop.xlane.xlu0 %1602
        %v1604 = vsub.f32 %v1594, %v1600
        %v1605 = vsub.f32 %v1596, %v1603
        %v1606 = vmul.f32 %v1604, 1.442695
        %v1607 = vpow.pop %v1606
        %v1608 = vmul.f32 %v1605, 1.442695
        %v1609 = vpow.pop %v1608
        %v1610 = vsel %vm1365, %v1607, 0.0
        %1611 = vadd.xlane.f32.xlu0 %v1610
        %v1612 = vpop.xlane.xlu0 %1611
        %v1613 = vsel %vm1365, %v1609, 0.0
        %1614 = vadd.xlane.f32.xlu0 %v1613
        %v1615 = vpop.xlane.xlu0 %1614
        %v1616 = vrcp.pop %v1612
        %v1617 = vrcp.pop %v1615
        %v1618 = vmul.f32 %v1607, %v1616
        %v1619 = vmul.f32 %v1609, %v1617
        %v1620 = vpack.c.bf16 %v1619, %v1618
        %1621 = vrot.lane.b32.xlu0 %v1343, 32
        %v1622 = vpop.permute.xlu0 %1621
        %v1625 = vsel %vm1365, %v1620, 0
        %1627 = vmatpush.bf16.msra.mxu0 0
        %1628 = vmatpush.bf16.msra.mxu0 0
        %1629 = vmatpush.bf16.msra.mxu0 0
        %1630 = vmatpush.bf16.msra.mxu0 0
        %1631 = vmatpush.bf16.msra.mxu0 0
        %1632 = vmatpush.bf16.msra.mxu0 0
        %1633 = vmatpush.bf16.msra.mxu0 0
        %1634 = vmatpush.bf16.msra.mxu0 %v1622
        %1635 = vmatmul.bf16.gmra.mxu0 %v1625
        %v1636 = vpop.f32.mrf.mxu0
        %v1637 = vadd.f32 0.0, %v1636
        %v1638 = vpop.f32.mrf.mxu0
        %v1639 = vadd.f32 0.0, %v1638
        %1640 = vdwg.mxu0
        %v1641 = vpack.c.bf16 %v1637, %v1637
        %v1642 = vpack.c.bf16 %v1639, %v1639
        %1645 = vrot.lane.b32.xlu0 %v1641, 96
        %v1646 = vpop.permute.xlu0 %1645
        %1647 = vrot.lane.b32.xlu0 %v1642, 96
        %v1648 = vpop.permute.xlu0 %1647
        %vm1651 = vcmask 1044224
        %1652 = vst.msk [vmem:[#allocation3] sm:$0xf] %vm1651, %v1646
        %1653 = vst.msk [vmem:[#allocation3 + $0x4] sm:$0xf] %vm1651, %v1648
        %v1654 = vld [vmem:[#allocation3] sm:$0xf]
        %v1655 = vld [vmem:[#allocation3 + $0x4] sm:$0xf]
        %v1656 = vld [vmem:[%s659] sm:$0xf]
        %v1657 = vld [vmem:[%s659 + $0x4] sm:$0xf]
        %v1658 = vld [vmem:[%s659 + $0x8] sm:$0xf]
        %v1659 = vld [vmem:[%s659 + $0xc] sm:$0xf]
        %v1660 = vld [vmem:[%s659 + $0x10] sm:$0xf]
        %v1661 = vld [vmem:[%s659 + $0x14] sm:$0xf]
        %v1662 = vld [vmem:[%s659 + $0x18] sm:$0xf]
        %v1663 = vld [vmem:[%s659 + $0x1c] sm:$0xf]
        %v1664 = vld [vmem:[%s659 + $0x20] sm:$0xf]
        %v1665 = vld [vmem:[%s659 + $0x24] sm:$0xf]
        %v1666 = vld [vmem:[%s659 + $0x28] sm:$0xf]
        %v1667 = vld [vmem:[%s659 + $0x2c] sm:$0xf]
        %v1668 = vld [vmem:[%s659 + $0x30] sm:$0xf]
        %v1669 = vld [vmem:[%s659 + $0x34] sm:$0xf]
        %v1670 = vld [vmem:[%s659 + $0x38] sm:$0xf]
        %v1671 = vld [vmem:[%s659 + $0x3c] sm:$0xf]
        %v1674 = vunpack.c.l.b16 %v1654
        %v1675 = vunpack.c.l.b16 %v1655
        %v1676 = vpack.c.b16 %v1675, %v1674
        %v1694 = vunpack.c.l.b16 %v1656
        %v1695 = vunpack.c.l.b16 %v1657
        %v1696 = vunpack.c.l.b16 %v1658
        %v1697 = vunpack.c.l.b16 %v1659
        %v1698 = vunpack.c.l.b16 %v1660
        %v1699 = vunpack.c.l.b16 %v1661
        %v1700 = vunpack.c.l.b16 %v1662
        %v1701 = vunpack.c.l.b16 %v1663
        %v1702 = vunpack.c.l.b16 %v1664
        %v1703 = vunpack.c.l.b16 %v1665
        %v1704 = vunpack.c.l.b16 %v1666
        %v1705 = vunpack.c.l.b16 %v1667
        %v1706 = vunpack.c.l.b16 %v1668
        %v1707 = vunpack.c.l.b16 %v1669
        %v1708 = vunpack.c.l.b16 %v1670
        %v1709 = vunpack.c.l.b16 %v1671
        %v1710 = vpack.c.b16 %v1695, %v1694
        %v1711 = vpack.c.b16 %v1697, %v1696
        %v1712 = vpack.c.b16 %v1699, %v1698
        %v1713 = vpack.c.b16 %v1701, %v1700
        %v1714 = vpack.c.b16 %v1703, %v1702
        %v1715 = vpack.c.b16 %v1705, %v1704
        %v1716 = vpack.c.b16 %v1707, %v1706
        %v1717 = vpack.c.b16 %v1709, %v1708
        %1726 = vmatpush.bf16.msra.mxu0 %v1717
        %1727 = vmatpush.bf16.msra.mxu0 %v1716
        %1728 = vmatpush.bf16.msra.mxu0 %v1715
        %1729 = vmatpush.bf16.msra.mxu0 %v1714
        %1730 = vmatpush.bf16.msra.mxu0 %v1713
        %1731 = vmatpush.bf16.msra.mxu0 %v1712
        %1732 = vmatpush.bf16.msra.mxu0 %v1711
        %1733 = vmatpush.bf16.msra.mxu0 %v1710
        %1734 = vmatmul.bf16.gmra.mxu0 %v1676
        %v1735 = vpop.f32.mrf.mxu0
        %v1736 = vadd.f32 0.0, %v1735
        %v1737 = vpop.f32.mrf.mxu0
        %v1738 = vadd.f32 0.0, %v1737
        %1739 = vdwg.mxu0
        %v1740 = vadd.f32 %v820, %v1736
        %v1741 = vadd.f32 %v821, %v1738
        %v1742 = vld [vmem:[%s662] sm:$0x1]
        %v1743 = vunpack.c.l.bf16 %v1742
        %v1744 = vmul.f32 %v1740, %v1740
        %v1745 = vmul.f32 %v1741, %v1741
        %1746 = vadd.xlane.f32.xlu0 %v1744
        %v1747 = vpop.xlane.xlu0 %1746
        %1748 = vadd.xlane.f32.xlu0 %v1745
        %v1749 = vpop.xlane.xlu0 %1748
        %v1750 = vmul.f32 %v1747, %v838
        %v1751 = vmul.f32 %v1749, %v838
        %v1752 = vadd.f32 %v1750, 1e-06
        %v1753 = vadd.f32 %v1751, 1e-06
        %v1754 = vrsqrt.pop %v1752
        %v1755 = vmul.f32 %v1754, %v1752
        %v1756 = vmul.f32 %v1755, %v1754
        %v1757 = vmul.f32 0.5, %v1756
        %v1758 = vsub.f32 1.5, %v1757
        %v1759 = vmul.f32 %v1754, %v1758
        %vm1760 = vweird.f32 %v1752
        %vm1761 = vweird.f32 %v1754
        %vm1762 = vmor %vm1760, %vm1761
        %v1763 = vsel %vm1762, %v1754, %v1759
        %v1764 = vrsqrt.pop %v1753
        %v1765 = vmul.f32 %v1764, %v1753
        %v1766 = vmul.f32 %v1765, %v1764
        %v1767 = vmul.f32 0.5, %v1766
        %v1768 = vsub.f32 1.5, %v1767
        %v1769 = vmul.f32 %v1764, %v1768
        %vm1770 = vweird.f32 %v1753
        %vm1771 = vweird.f32 %v1764
        %vm1772 = vmor %vm1770, %vm1771
        %v1773 = vsel %vm1772, %v1764, %v1769
        %v1774 = vmul.f32 %v1740, %v1763
        %v1775 = vmul.f32 %v1741, %v1773
        %v1776 = vperm.slane %v1743, 0
        %v1777 = vmul.f32 %v1774, %v1776
        %v1778 = vmul.f32 %v1775, %v1776
        %v1779 = vpack.c.bf16 %v1778, %v1777
        %v1780 = vld [vmem:[%s667] sm:$0xff]
        %v1781 = vld [vmem:[%s667 + $0x8] sm:$0xff]
        %v1782 = vld [vmem:[%s667 + $0x10] sm:$0xff]
        %v1783 = vld [vmem:[%s667 + $0x18] sm:$0xff]
        %v1784 = vld [vmem:[%s667 + $0x20] sm:$0xff]
        %v1785 = vld [vmem:[%s667 + $0x28] sm:$0xff]
        %v1786 = vld [vmem:[%s667 + $0x30] sm:$0xff]
        %v1787 = vld [vmem:[%s667 + $0x38] sm:$0xff]
        %v1788 = vld [vmem:[%s667 + $0x40] sm:$0xff]
        %v1789 = vld [vmem:[%s667 + $0x48] sm:$0xff]
        %v1790 = vld [vmem:[%s667 + $0x50] sm:$0xff]
        %v1791 = vld [vmem:[%s667 + $0x58] sm:$0xff]
        %v1792 = vld [vmem:[%s667 + $0x60] sm:$0xff]
        %v1793 = vld [vmem:[%s667 + $0x68] sm:$0xff]
        %v1794 = vld [vmem:[%s667 + $0x70] sm:$0xff]
        %v1795 = vld [vmem:[%s667 + $0x78] sm:$0xff]
        %v1796 = vld [vmem:[%s667 + $0x80] sm:$0xff]
        %v1797 = vld [vmem:[%s667 + $0x88] sm:$0xff]
        %v1798 = vld [vmem:[%s667 + $0x90] sm:$0xff]
        %v1799 = vld [vmem:[%s667 + $0x98] sm:$0xff]
        %v1800 = vld [vmem:[%s667 + $0xa0] sm:$0xff]
        %v1801 = vld [vmem:[%s667 + $0xa8] sm:$0xff]
        %v1802 = vld [vmem:[%s667 + $0xb0] sm:$0xff]
        %v1803 = vld [vmem:[%s667 + $0xb8] sm:$0xff]
        %v1804 = vld [vmem:[%s667 + $0xc0] sm:$0xff]
        %v1805 = vld [vmem:[%s667 + $0xc8] sm:$0xff]
        %v1806 = vld [vmem:[%s667 + $0xd0] sm:$0xff]
        %v1807 = vld [vmem:[%s667 + $0xd8] sm:$0xff]
        %v1808 = vld [vmem:[%s667 + $0xe0] sm:$0xff]
        %v1809 = vld [vmem:[%s667 + $0xe8] sm:$0xff]
        %v1810 = vld [vmem:[%s667 + $0xf0] sm:$0xff]
        %v1811 = vld [vmem:[%s667 + $0xf8] sm:$0xff]
        %v1844 = vunpack.c.l.b16 %v1780
        %v1845 = vunpack.c.h.b16 %v1780
        %v1846 = vunpack.c.l.b16 %v1781
        %v1847 = vunpack.c.h.b16 %v1781
        %v1848 = vunpack.c.l.b16 %v1782
        %v1849 = vunpack.c.h.b16 %v1782
        %v1850 = vunpack.c.l.b16 %v1783
        %v1851 = vunpack.c.h.b16 %v1783
        %v1852 = vunpack.c.l.b16 %v1784
        %v1853 = vunpack.c.h.b16 %v1784
        %v1854 = vunpack.c.l.b16 %v1785
        %v1855 = vunpack.c.h.b16 %v1785
        %v1856 = vunpack.c.l.b16 %v1786
        %v1857 = vunpack.c.h.b16 %v1786
        %v1858 = vunpack.c.l.b16 %v1787
        %v1859 = vunpack.c.h.b16 %v1787
        %v1860 = vunpack.c.l.b16 %v1788
        %v1861 = vunpack.c.h.b16 %v1788
        %v1862 = vunpack.c.l.b16 %v1789
        %v1863 = vunpack.c.h.b16 %v1789
        %v1864 = vunpack.c.l.b16 %v1790
        %v1865 = vunpack.c.h.b16 %v1790
        %v1866 = vunpack.c.l.b16 %v1791
        %v1867 = vunpack.c.h.b16 %v1791
        %v1868 = vunpack.c.l.b16 %v1792
        %v1869 = vunpack.c.h.b16 %v1792
        %v1870 = vunpack.c.l.b16 %v1793
        %v1871 = vunpack.c.h.b16 %v1793
        %v1872 = vunpack.c.l.b16 %v1794
        %v1873 = vunpack.c.h.b16 %v1794
        %v1874 = vunpack.c.l.b16 %v1795
        %v1875 = vunpack.c.h.b16 %v1795
        %v1876 = vunpack.c.l.b16 %v1796
        %v1877 = vunpack.c.h.b16 %v1796
        %v1878 = vunpack.c.l.b16 %v1797
        %v1879 = vunpack.c.h.b16 %v1797
        %v1880 = vunpack.c.l.b16 %v1798
        %v1881 = vunpack.c.h.b16 %v1798
        %v1882 = vunpack.c.l.b16 %v1799
        %v1883 = vunpack.c.h.b16 %v1799
        %v1884 = vunpack.c.l.b16 %v1800
        %v1885 = vunpack.c.h.b16 %v1800
        %v1886 = vunpack.c.l.b16 %v1801
        %v1887 = vunpack.c.h.b16 %v1801
        %v1888 = vunpack.c.l.b16 %v1802
        %v1889 = vunpack.c.h.b16 %v1802
        %v1890 = vunpack.c.l.b16 %v1803
        %v1891 = vunpack.c.h.b16 %v1803
        %v1892 = vunpack.c.l.b16 %v1804
        %v1893 = vunpack.c.h.b16 %v1804
        %v1894 = vunpack.c.l.b16 %v1805
        %v1895 = vunpack.c.h.b16 %v1805
        %v1896 = vunpack.c.l.b16 %v1806
        %v1897 = vunpack.c.h.b16 %v1806
        %v1898 = vunpack.c.l.b16 %v1807
        %v1899 = vunpack.c.h.b16 %v1807
        %v1900 = vunpack.c.l.b16 %v1808
        %v1901 = vunpack.c.h.b16 %v1808
        %v1902 = vunpack.c.l.b16 %v1809
        %v1903 = vunpack.c.h.b16 %v1809
        %v1904 = vunpack.c.l.b16 %v1810
        %v1905 = vunpack.c.h.b16 %v1810
        %v1906 = vunpack.c.l.b16 %v1811
        %v1907 = vunpack.c.h.b16 %v1811
        %v1908 = vpack.c.b16 %v1848, %v1844
        %v1909 = vpack.c.b16 %v1849, %v1845
        %v1910 = vpack.c.b16 %v1850, %v1846
        %v1911 = vpack.c.b16 %v1851, %v1847
        %v1912 = vpack.c.b16 %v1856, %v1852
        %v1913 = vpack.c.b16 %v1857, %v1853
        %v1914 = vpack.c.b16 %v1858, %v1854
        %v1915 = vpack.c.b16 %v1859, %v1855
        %v1916 = vpack.c.b16 %v1864, %v1860
        %v1917 = vpack.c.b16 %v1865, %v1861
        %v1918 = vpack.c.b16 %v1866, %v1862
        %v1919 = vpack.c.b16 %v1867, %v1863
        %v1920 = vpack.c.b16 %v1872, %v1868
        %v1921 = vpack.c.b16 %v1873, %v1869
        %v1922 = vpack.c.b16 %v1874, %v1870
        %v1923 = vpack.c.b16 %v1875, %v1871
        %v1924 = vpack.c.b16 %v1880, %v1876
        %v1925 = vpack.c.b16 %v1881, %v1877
        %v1926 = vpack.c.b16 %v1882, %v1878
        %v1927 = vpack.c.b16 %v1883, %v1879
        %v1928 = vpack.c.b16 %v1888, %v1884
        %v1929 = vpack.c.b16 %v1889, %v1885
        %v1930 = vpack.c.b16 %v1890, %v1886
        %v1931 = vpack.c.b16 %v1891, %v1887
        %v1932 = vpack.c.b16 %v1896, %v1892
        %v1933 = vpack.c.b16 %v1897, %v1893
        %v1934 = vpack.c.b16 %v1898, %v1894
        %v1935 = vpack.c.b16 %v1899, %v1895
        %v1936 = vpack.c.b16 %v1904, %v1900
        %v1937 = vpack.c.b16 %v1905, %v1901
        %v1938 = vpack.c.b16 %v1906, %v1902
        %v1939 = vpack.c.b16 %v1907, %v1903
        %1972 = vmatpush.bf16.msra.mxu0 %v1936
        %1973 = vmatpush.bf16.msra.mxu0 %v1932
        %1974 = vmatpush.bf16.msra.mxu0 %v1928
        %1975 = vmatpush.bf16.msra.mxu0 %v1924
        %1976 = vmatpush.bf16.msra.mxu0 %v1920
        %1977 = vmatpush.bf16.msra.mxu0 %v1916
        %1978 = vmatpush.bf16.msra.mxu0 %v1912
        %1979 = vmatpush.bf16.msra.mxu0 %v1908
        %1980 = vmatmul.bf16.gmra.mxu0 %v1779
        %v1981 = vpop.f32.mrf.mxu0
        %v1982 = vadd.f32 0.0, %v1981
        %v1983 = vpop.f32.mrf.mxu0
        %v1984 = vadd.f32 0.0, %v1983
        %1985 = vdwg.mxu0
        %1986 = vmatpush.bf16.msra.mxu0 %v1937
        %1987 = vmatpush.bf16.msra.mxu0 %v1933
        %1988 = vmatpush.bf16.msra.mxu0 %v1929
        %1989 = vmatpush.bf16.msra.mxu0 %v1925
        %1990 = vmatpush.bf16.msra.mxu0 %v1921
        %1991 = vmatpush.bf16.msra.mxu0 %v1917
        %1992 = vmatpush.bf16.msra.mxu0 %v1913
        %1993 = vmatpush.bf16.msra.mxu0 %v1909
        %1994 = vmatmul.bf16.gmra.mxu0 %v1779
        %v1995 = vpop.f32.mrf.mxu0
        %v1996 = vadd.f32 0.0, %v1995
        %v1997 = vpop.f32.mrf.mxu0
        %v1998 = vadd.f32 0.0, %v1997
        %1999 = vdwg.mxu0
        %2000 = vmatpush.bf16.msra.mxu0 %v1938
        %2001 = vmatpush.bf16.msra.mxu0 %v1934
        %2002 = vmatpush.bf16.msra.mxu0 %v1930
        %2003 = vmatpush.bf16.msra.mxu0 %v1926
        %2004 = vmatpush.bf16.msra.mxu0 %v1922
        %2005 = vmatpush.bf16.msra.mxu0 %v1918
        %2006 = vmatpush.bf16.msra.mxu0 %v1914
        %2007 = vmatpush.bf16.msra.mxu0 %v1910
        %2008 = vmatmul.bf16.gmra.mxu0 %v1779
        %v2009 = vpop.f32.mrf.mxu0
        %v2010 = vadd.f32 0.0, %v2009
        %v2011 = vpop.f32.mrf.mxu0
        %v2012 = vadd.f32 0.0, %v2011
        %2013 = vdwg.mxu0
        %2014 = vmatpush.bf16.msra.mxu0 %v1939
        %2015 = vmatpush.bf16.msra.mxu0 %v1935
        %2016 = vmatpush.bf16.msra.mxu0 %v1931
        %2017 = vmatpush.bf16.msra.mxu0 %v1927
        %2018 = vmatpush.bf16.msra.mxu0 %v1923
        %2019 = vmatpush.bf16.msra.mxu0 %v1919
        %2020 = vmatpush.bf16.msra.mxu0 %v1915
        %2021 = vmatpush.bf16.msra.mxu0 %v1911
        %2022 = vmatmul.bf16.gmra.mxu0 %v1779
        %v2023 = vpop.f32.mrf.mxu0
        %v2024 = vadd.f32 0.0, %v2023
        %v2025 = vpop.f32.mrf.mxu0
        %v2026 = vadd.f32 0.0, %v2025
        %2027 = vdwg.mxu0
        %v2028 = vxor.u32 %v1982, 2147483648
        %v2029 = vxor.u32 %v1996, 2147483648
        %v2030 = vxor.u32 %v1984, 2147483648
        %v2031 = vxor.u32 %v1998, 2147483648
        %v2032 = vmul.f32 %v2028, 1.442695
        %v2033 = vpow.pop %v2032
        %v2034 = vmul.f32 %v2029, 1.442695
        %v2035 = vpow.pop %v2034
        %v2036 = vmul.f32 %v2030, 1.442695
        %v2037 = vpow.pop %v2036
        %v2038 = vmul.f32 %v2031, 1.442695
        %v2039 = vpow.pop %v2038
        %v2040 = vadd.f32 %v2033, 1.0
        %v2041 = vadd.f32 %v2035, 1.0
        %v2042 = vadd.f32 %v2037, 1.0
        %v2043 = vadd.f32 %v2039, 1.0
        %v2044 = vrcp.pop %v2040
        %v2045 = vmul.f32 %v2040, %v2044
        %v2046 = vsub.f32 1.0, %v2045
        %v2047 = vmul.f32 %v2044, %v2046
        %v2048 = vadd.f32 %v2044, %v2047
        %vm2049 = vweird.f32 %v2040
        %vm2050 = vweird.f32 %v2044
        %vm2051 = vmor %vm2049, %vm2050
        %v2052 = vsel %vm2051, %v2044, %v2048
        %v2053 = vand.u32 2147483647, %v2040
        %vm2054 = vcmp.eq.f32.partialorder %v2053, 8.507059e+37
        %v2055 = vand.u32 %v2040, 2147483648
        %v2056 = vor.u32 1.1754944e-38, %v2055
        %v2057 = vsel %vm2054, %v2056, %v2052
        %v2058 = vmul.f32 1.0, %v2057
        %v2059 = vrcp.pop %v2041
        %v2060 = vmul.f32 %v2041, %v2059
        %v2061 = vsub.f32 1.0, %v2060
        %v2062 = vmul.f32 %v2059, %v2061
        %v2063 = vadd.f32 %v2059, %v2062
        %vm2064 = vweird.f32 %v2041
        %vm2065 = vweird.f32 %v2059
        %vm2066 = vmor %vm2064, %vm2065
        %v2067 = vsel %vm2066, %v2059, %v2063
        %v2068 = vand.u32 2147483647, %v2041
        %vm2069 = vcmp.eq.f32.partialorder %v2068, 8.507059e+37
        %v2070 = vand.u32 %v2041, 2147483648
        %v2071 = vor.u32 1.1754944e-38, %v2070
        %v2072 = vsel %vm2069, %v2071, %v2067
        %v2073 = vmul.f32 1.0, %v2072
        %v2074 = vrcp.pop %v2042
        %v2075 = vmul.f32 %v2042, %v2074
        %v2076 = vsub.f32 1.0, %v2075
        %v2077 = vmul.f32 %v2074, %v2076
        %v2078 = vadd.f32 %v2074, %v2077
        %vm2079 = vweird.f32 %v2042
        %vm2080 = vweird.f32 %v2074
        %vm2081 = vmor %vm2079, %vm2080
        %v2082 = vsel %vm2081, %v2074, %v2078
        %v2083 = vand.u32 2147483647, %v2042
        %vm2084 = vcmp.eq.f32.partialorder %v2083, 8.507059e+37
        %v2085 = vand.u32 %v2042, 2147483648
        %v2086 = vor.u32 1.1754944e-38, %v2085
        %v2087 = vsel %vm2084, %v2086, %v2082
        %v2088 = vmul.f32 1.0, %v2087
        %v2089 = vrcp.pop %v2043
        %v2090 = vmul.f32 %v2043, %v2089
        %v2091 = vsub.f32 1.0, %v2090
        %v2092 = vmul.f32 %v2089, %v2091
        %v2093 = vadd.f32 %v2089, %v2092
        %vm2094 = vweird.f32 %v2043
        %vm2095 = vweird.f32 %v2089
        %vm2096 = vmor %vm2094, %vm2095
        %v2097 = vsel %vm2096, %v2089, %v2093
        %v2098 = vand.u32 2147483647, %v2043
        %vm2099 = vcmp.eq.f32.partialorder %v2098, 8.507059e+37
        %v2100 = vand.u32 %v2043, 2147483648
        %v2101 = vor.u32 1.1754944e-38, %v2100
        %v2102 = vsel %vm2099, %v2101, %v2097
        %v2103 = vmul.f32 1.0, %v2102
        %v2104 = vmul.f32 %v1982, %v2058
        %v2105 = vmul.f32 %v1996, %v2073
        %v2106 = vmul.f32 %v1984, %v2088
        %v2107 = vmul.f32 %v1998, %v2103
        %v2108 = vmul.f32 %v2104, %v2010
        %v2109 = vmul.f32 %v2105, %v2024
        %v2110 = vmul.f32 %v2106, %v2012
        %v2111 = vmul.f32 %v2107, %v2026
        %v2112 = vpack.c.bf16 %v2110, %v2108
        %v2113 = vpack.c.bf16 %v2111, %v2109
        %v2114 = vld [vmem:[%s559] sm:$0xf]
        %v2115 = vld [vmem:[%s559 + $0x4] sm:$0xf]
        %v2116 = vld [vmem:[%s559 + $0x8] sm:$0xf]
        %v2117 = vld [vmem:[%s559 + $0xc] sm:$0xf]
        %v2118 = vld [vmem:[%s559 + $0x10] sm:$0xf]
        %v2119 = vld [vmem:[%s559 + $0x14] sm:$0xf]
        %v2120 = vld [vmem:[%s559 + $0x18] sm:$0xf]
        %v2121 = vld [vmem:[%s559 + $0x1c] sm:$0xf]
        %v2122 = vld [vmem:[%s559 + $0x20] sm:$0xf]
        %v2123 = vld [vmem:[%s559 + $0x24] sm:$0xf]
        %v2124 = vld [vmem:[%s559 + $0x28] sm:$0xf]
        %v2125 = vld [vmem:[%s559 + $0x2c] sm:$0xf]
        %v2126 = vld [vmem:[%s559 + $0x30] sm:$0xf]
        %v2127 = vld [vmem:[%s559 + $0x34] sm:$0xf]
        %v2128 = vld [vmem:[%s559 + $0x38] sm:$0xf]
        %v2129 = vld [vmem:[%s559 + $0x3c] sm:$0xf]
        %v2130 = vld [vmem:[%s559 + $0x40] sm:$0xf]
        %v2131 = vld [vmem:[%s559 + $0x44] sm:$0xf]
        %v2132 = vld [vmem:[%s559 + $0x48] sm:$0xf]
        %v2133 = vld [vmem:[%s559 + $0x4c] sm:$0xf]
        %v2134 = vld [vmem:[%s559 + $0x50] sm:$0xf]
        %v2135 = vld [vmem:[%s559 + $0x54] sm:$0xf]
        %v2136 = vld [vmem:[%s559 + $0x58] sm:$0xf]
        %v2137 = vld [vmem:[%s559 + $0x5c] sm:$0xf]
        %v2138 = vld [vmem:[%s559 + $0x60] sm:$0xf]
        %v2139 = vld [vmem:[%s559 + $0x64] sm:$0xf]
        %v2140 = vld [vmem:[%s559 + $0x68] sm:$0xf]
        %v2141 = vld [vmem:[%s559 + $0x6c] sm:$0xf]
        %v2142 = vld [vmem:[%s559 + $0x70] sm:$0xf]
        %v2143 = vld [vmem:[%s559 + $0x74] sm:$0xf]
        %v2144 = vld [vmem:[%s559 + $0x78] sm:$0xf]
        %v2145 = vld [vmem:[%s559 + $0x7c] sm:$0xf]
        %v2178 = vunpack.c.l.b16 %v2114
        %v2179 = vunpack.c.l.b16 %v2115
        %v2180 = vunpack.c.l.b16 %v2116
        %v2181 = vunpack.c.l.b16 %v2117
        %v2182 = vunpack.c.l.b16 %v2118
        %v2183 = vunpack.c.l.b16 %v2119
        %v2184 = vunpack.c.l.b16 %v2120
        %v2185 = vunpack.c.l.b16 %v2121
        %v2186 = vunpack.c.l.b16 %v2122
        %v2187 = vunpack.c.l.b16 %v2123
        %v2188 = vunpack.c.l.b16 %v2124
        %v2189 = vunpack.c.l.b16 %v2125
        %v2190 = vunpack.c.l.b16 %v2126
        %v2191 = vunpack.c.l.b16 %v2127
        %v2192 = vunpack.c.l.b16 %v2128
        %v2193 = vunpack.c.l.b16 %v2129
        %v2194 = vunpack.c.l.b16 %v2130
        %v2195 = vunpack.c.l.b16 %v2131
        %v2196 = vunpack.c.l.b16 %v2132
        %v2197 = vunpack.c.l.b16 %v2133
        %v2198 = vunpack.c.l.b16 %v2134
        %v2199 = vunpack.c.l.b16 %v2135
        %v2200 = vunpack.c.l.b16 %v2136
        %v2201 = vunpack.c.l.b16 %v2137
        %v2202 = vunpack.c.l.b16 %v2138
        %v2203 = vunpack.c.l.b16 %v2139
        %v2204 = vunpack.c.l.b16 %v2140
        %v2205 = vunpack.c.l.b16 %v2141
        %v2206 = vunpack.c.l.b16 %v2142
        %v2207 = vunpack.c.l.b16 %v2143
        %v2208 = vunpack.c.l.b16 %v2144
        %v2209 = vunpack.c.l.b16 %v2145
        %v2210 = vpack.c.b16 %v2179, %v2178
        %v2211 = vpack.c.b16 %v2181, %v2180
        %v2212 = vpack.c.b16 %v2183, %v2182
        %v2213 = vpack.c.b16 %v2185, %v2184
        %v2214 = vpack.c.b16 %v2187, %v2186
        %v2215 = vpack.c.b16 %v2189, %v2188
        %v2216 = vpack.c.b16 %v2191, %v2190
        %v2217 = vpack.c.b16 %v2193, %v2192
        %v2218 = vpack.c.b16 %v2195, %v2194
        %v2219 = vpack.c.b16 %v2197, %v2196
        %v2220 = vpack.c.b16 %v2199, %v2198
        %v2221 = vpack.c.b16 %v2201, %v2200
        %v2222 = vpack.c.b16 %v2203, %v2202
        %v2223 = vpack.c.b16 %v2205, %v2204
        %v2224 = vpack.c.b16 %v2207, %v2206
        %v2225 = vpack.c.b16 %v2209, %v2208
        %2242 = vmatpush.bf16.msra.mxu0 %v2217
        %2243 = vmatpush.bf16.msra.mxu0 %v2216
        %2244 = vmatpush.bf16.msra.mxu0 %v2215
        %2245 = vmatpush.bf16.msra.mxu0 %v2214
        %2246 = vmatpush.bf16.msra.mxu0 %v2213
        %2247 = vmatpush.bf16.msra.mxu0 %v2212
        %2248 = vmatpush.bf16.msra.mxu0 %v2211
        %2249 = vmatpush.bf16.msra.mxu0 %v2210
        %2250 = vmatmul.bf16.gmra.mxu0 %v2112
        %v2251 = vpop.f32.mrf.mxu0
        %v2252 = vadd.f32 0.0, %v2251
        %v2253 = vpop.f32.mrf.mxu0
        %v2254 = vadd.f32 0.0, %v2253
        %2255 = vdwg.mxu0
        %2256 = vmatpush.bf16.msra.mxu0 %v2225
        %2257 = vmatpush.bf16.msra.mxu0 %v2224
        %2258 = vmatpush.bf16.msra.mxu0 %v2223
        %2259 = vmatpush.bf16.msra.mxu0 %v2222
        %2260 = vmatpush.bf16.msra.mxu0 %v2221
        %2261 = vmatpush.bf16.msra.mxu0 %v2220
        %2262 = vmatpush.bf16.msra.mxu0 %v2219
        %2263 = vmatpush.bf16.msra.mxu0 %v2218
        %2264 = vmatmul.bf16.gmra.mxu0 %v2113
        %v2265 = vpop.f32.mrf.mxu0
        %v2266 = vadd.f32 %v2252, %v2265
        %v2267 = vpop.f32.mrf.mxu0
        %v2268 = vadd.f32 %v2254, %v2267
        %2269 = vdwg.mxu0
        %v2270 = vadd.f32 %v1740, %v2266
        %v2271 = vadd.f32 %v1741, %v2268
        %2272 = vst [vmem:[#allocation2] sm:$0xff] %v2270
        %2273 = vst [vmem:[#allocation2 + $0x8] sm:$0xff] %v2271
        %p2274 = scmp.eq.s32.totalorder %s35, 1
        // Predicated region
        $region93: #{owl3_logits_forward.1} parent=79 // pred_check
          %p2275 = pneg %p2274
        $region94: #{owl3_logits_forward.1} parent=79 // pred_check_branch
          %2277 = sbr.rel (%p2275) target = $region96
        $region95: #{owl3_logits_forward.1} parent=79 // pred_region
          %v2278 = vld [vmem:[%s13] sm:$0x1]
          %v2279 = vunpack.c.l.bf16 %v2278
          %v2280 = vmul.f32 %v2270, %v2270
          %v2281 = vmul.f32 %v2271, %v2271
          %2282 = vadd.xlane.f32.xlu0 %v2280
          %v2283 = vpop.xlane.xlu0 %2282
          %2284 = vadd.xlane.f32.xlu0 %v2281
          %v2285 = vpop.xlane.xlu0 %2284
          %v2286 = vmul.f32 %v2283, %v838
          %v2287 = vmul.f32 %v2285, %v838
          %v2288 = vadd.f32 %v2286, 1e-06
          %v2289 = vadd.f32 %v2287, 1e-06
          %v2290 = vrsqrt.pop %v2288
          %v2291 = vmul.f32 %v2290, %v2288
          %v2292 = vmul.f32 %v2291, %v2290
          %v2293 = vmul.f32 0.5, %v2292
          %v2294 = vsub.f32 1.5, %v2293
          %v2295 = vmul.f32 %v2290, %v2294
          %vm2296 = vweird.f32 %v2288
          %vm2297 = vweird.f32 %v2290
          %vm2298 = vmor %vm2296, %vm2297
          %v2299 = vsel %vm2298, %v2290, %v2295
          %v2300 = vrsqrt.pop %v2289
          %v2301 = vmul.f32 %v2300, %v2289
          %v2302 = vmul.f32 %v2301, %v2300
          %v2303 = vmul.f32 0.5, %v2302
          %v2304 = vsub.f32 1.5, %v2303
          %v2305 = vmul.f32 %v2300, %v2304
          %vm2306 = vweird.f32 %v2289
          %vm2307 = vweird.f32 %v2300
          %vm2308 = vmor %vm2306, %vm2307
          %v2309 = vsel %vm2308, %v2300, %v2305
          %v2310 = vmul.f32 %v2270, %v2299
          %v2311 = vmul.f32 %v2271, %v2309
          %v2312 = vperm.slane %v2279, 0
          %v2313 = vmul.f32 %v2310, %v2312
          %v2314 = vmul.f32 %v2311, %v2312
          %v2315 = vpack.c.bf16 %v2314, %v2313
          %v2316 = vld [vmem:[%s14] sm:$0xff]
          %v2317 = vld [vmem:[%s14 + $0x8] sm:$0xff]
          %v2318 = vld [vmem:[%s14 + $0x10] sm:$0xff]
          %v2319 = vld [vmem:[%s14 + $0x18] sm:$0xff]
          %v2320 = vld [vmem:[%s14 + $0x20] sm:$0xff]
          %v2321 = vld [vmem:[%s14 + $0x28] sm:$0xff]
          %v2322 = vld [vmem:[%s14 + $0x30] sm:$0xff]
          %v2323 = vld [vmem:[%s14 + $0x38] sm:$0xff]
          %v2324 = vld [vmem:[%s14 + $0x40] sm:$0xff]
          %v2325 = vld [vmem:[%s14 + $0x48] sm:$0xff]
          %v2326 = vld [vmem:[%s14 + $0x50] sm:$0xff]
          %v2327 = vld [vmem:[%s14 + $0x58] sm:$0xff]
          %v2328 = vld [vmem:[%s14 + $0x60] sm:$0xff]
          %v2329 = vld [vmem:[%s14 + $0x68] sm:$0xff]
          %v2330 = vld [vmem:[%s14 + $0x70] sm:$0xff]
          %v2331 = vld [vmem:[%s14 + $0x78] sm:$0xff]
          %v2348 = vunpack.c.l.b16 %v2316
          %v2349 = vunpack.c.h.b16 %v2316
          %v2350 = vunpack.c.l.b16 %v2317
          %v2351 = vunpack.c.h.b16 %v2317
          %v2352 = vunpack.c.l.b16 %v2318
          %v2353 = vunpack.c.h.b16 %v2318
          %v2354 = vunpack.c.l.b16 %v2319
          %v2355 = vunpack.c.h.b16 %v2319
          %v2356 = vunpack.c.l.b16 %v2320
          %v2357 = vunpack.c.h.b16 %v2320
          %v2358 = vunpack.c.l.b16 %v2321
          %v2359 = vunpack.c.h.b16 %v2321
          %v2360 = vunpack.c.l.b16 %v2322
          %v2361 = vunpack.c.h.b16 %v2322
          %v2362 = vunpack.c.l.b16 %v2323
          %v2363 = vunpack.c.h.b16 %v2323
          %v2364 = vunpack.c.l.b16 %v2324
          %v2365 = vunpack.c.h.b16 %v2324
          %v2366 = vunpack.c.l.b16 %v2325
          %v2367 = vunpack.c.h.b16 %v2325
          %v2368 = vunpack.c.l.b16 %v2326
          %v2369 = vunpack.c.h.b16 %v2326
          %v2370 = vunpack.c.l.b16 %v2327
          %v2371 = vunpack.c.h.b16 %v2327
          %v2372 = vunpack.c.l.b16 %v2328
          %v2373 = vunpack.c.h.b16 %v2328
          %v2374 = vunpack.c.l.b16 %v2329
          %v2375 = vunpack.c.h.b16 %v2329
          %v2376 = vunpack.c.l.b16 %v2330
          %v2377 = vunpack.c.h.b16 %v2330
          %v2378 = vunpack.c.l.b16 %v2331
          %v2379 = vunpack.c.h.b16 %v2331
          %v2380 = vpack.c.b16 %v2350, %v2348
          %v2381 = vpack.c.b16 %v2351, %v2349
          %v2382 = vpack.c.b16 %v2354, %v2352
          %v2383 = vpack.c.b16 %v2355, %v2353
          %v2384 = vpack.c.b16 %v2358, %v2356
          %v2385 = vpack.c.b16 %v2359, %v2357
          %v2386 = vpack.c.b16 %v2362, %v2360
          %v2387 = vpack.c.b16 %v2363, %v2361
          %v2388 = vpack.c.b16 %v2366, %v2364
          %v2389 = vpack.c.b16 %v2367, %v2365
          %v2390 = vpack.c.b16 %v2370, %v2368
          %v2391 = vpack.c.b16 %v2371, %v2369
          %v2392 = vpack.c.b16 %v2374, %v2372
          %v2393 = vpack.c.b16 %v2375, %v2373
          %v2394 = vpack.c.b16 %v2378, %v2376
          %v2395 = vpack.c.b16 %v2379, %v2377
          %2412 = vmatpush.bf16.msra.mxu0 %v2394
          %2413 = vmatpush.bf16.msra.mxu0 %v2392
          %2414 = vmatpush.bf16.msra.mxu0 %v2390
          %2415 = vmatpush.bf16.msra.mxu0 %v2388
          %2416 = vmatpush.bf16.msra.mxu0 %v2386
          %2417 = vmatpush.bf16.msra.mxu0 %v2384
          %2418 = vmatpush.bf16.msra.mxu0 %v2382
          %2419 = vmatpush.bf16.msra.mxu0 %v2380
          %2420 = vmatmul.bf16.gmra.mxu0 %v2315
          %v2421 = vpop.f32.mrf.mxu0
          %v2422 = vpop.f32.mrf.mxu0
          %v2423 = vadd.f32 0.0, %v2422
          %2424 = vdwg.mxu0
          %2425 = vmatpush.bf16.msra.mxu0 %v2395
          %2426 = vmatpush.bf16.msra.mxu0 %v2393
          %2427 = vmatpush.bf16.msra.mxu0 %v2391
          %2428 = vmatpush.bf16.msra.mxu0 %v2389
          %2429 = vmatpush.bf16.msra.mxu0 %v2387
          %2430 = vmatpush.bf16.msra.mxu0 %v2385
          %2431 = vmatpush.bf16.msra.mxu0 %v2383
          %2432 = vmatpush.bf16.msra.mxu0 %v2381
          %2433 = vmatmul.bf16.gmra.mxu0 %v2315
          %v2434 = vpop.f32.mrf.mxu0
          %v2435 = vpop.f32.mrf.mxu0
          %v2436 = vadd.f32 0.0, %v2435
          %2437 = vdwg.mxu0
          %2440 = vst [vmem:[#allocation1] sm:$0xff] %v2423
          %2441 = vst [vmem:[#allocation1 + $0x9] sm:$0xff] %v2436
          %s2442 = scalar_lea.vmem [#allocation1], 3
          %v2443 = vld [vmem:[%s2442] ss:$9 sm:$0xff]
          %v2445 = vlaneseq
          %vm2446 = vcmp.ge.s32.totalorder %v2445, 0
          %vm2447 = vcmp.lt.s32.totalorder %v2445, 256
          %vm2448 = vmand %vm2446, %vm2447
          %2449 = vst.msk [vmem:[%s671] sm:$0x3] %vm2448, %v2443
        $region96: #{owl3_logits_forward.1} parent=79 // pred_fallthru
          _
        %p2450 = scmp.lt.s32.totalorder %s34, 1
        %s2451 = scalar_select %p2450, %s34, 1
        %s2452 = smul.addr %s2451, 2
        %s2453 = scalar_lea.vmem %s15, %s2452
        // Predicated region
        $region97: #{owl3_logits_forward.1} parent=79 // pred_check
          %p2454 = pneg %p415
        $region98: #{owl3_logits_forward.1} parent=79 // pred_check_branch
          %2456 = sbr.rel (%p2454) target = $region100
        $region99: #{owl3_logits_forward.1} parent=79 // pred_region
          _
        $region100: #{owl3_logits_forward.1} parent=79 // pred_fallthru
          _
      $region80: #{owl3_logits_forward.1} parent=5 // pred_fallthru
        _
      %p2457 = scmp.le.s32.totalorder 2, %s25
      // Predicated region
      $region101: #{owl3_logits_forward.1} parent=5 // pred_check
        %p2458 = pneg %p2457
      $region102: #{owl3_logits_forward.1} parent=5 // pred_check_branch
        %2460 = sbr.rel (%p2458) target = $region104
      $region103: #{owl3_logits_forward.1} parent=5 // pred_region
        %s2461 = ssub.s32 %s25, 2
        // Predicated region
        $region105: #{owl3_logits_forward.1} parent=103 // pred_check
          %p2462 = pneg %p421
        $region106: #{owl3_logits_forward.1} parent=103 // pred_check_branch
          %2464 = sbr.rel (%p2462) target = $region108
        $region107: #{owl3_logits_forward.1} parent=103 // pred_region
          %p2465 = scmp.lt.s32.totalorder %s36, 1
          %s2466 = scalar_select %p2465, %s36, 1
          %s2467 = smul.addr %s2466, 2
          %s2468 = scalar_lea.vmem %s15, %s2467
        $region108: #{owl3_logits_forward.1} parent=103 // pred_fallthru
          _
      $region104: #{owl3_logits_forward.1} parent=5 // pred_fallthru
        _
    $region6: #{owl3_logits_forward.1} parent=1 // loop_footer
      %s29 = sadd.s32 1, %s25
    $region7: #{owl3_logits_forward.1} parent=1 // loop_footer_branch
      %24 = sbr.rel target = $region3
    $region8: #{owl3_logits_forward.1} parent=1 // loop_exit
      _
    %2469 = vsyncpa [#allocation5], 1
    %s2470 = scalar_lea.sflag [#allocation5], 1
    %2471 = vsyncpa %s2470, 1
    %2472 = vsyncpa [#allocation7], 1
    %s2473 = scalar_lea.sflag [#allocation7], 1
    %2474 = vsyncpa %s2473, 1

</llo_original>
